<compile_context>
chip_gen: v6e
topology: v6e:2x2x1
jax: 0.10.0
libtpu: 0.0.40
codegen_flags: <defaults>
</compile_context>

<pallas_src>
import jax
import jax.numpy as jnp
from jax import lax
from jax.experimental import pallas as pl
from jax.experimental.pallas import tpu as pltpu

# -----------------------------------------------------------------------------
# Synthetic configuration (mirrors the config fields used by the module)
# -----------------------------------------------------------------------------
NUM_SEM_CATEGORIES = 6
NON_SEM_CHANNELS = 4            # MC.NON_SEM_CHANNELS
MC_EXPLORED_MAP = 1             # MC.EXPLORED_MAP channel index
MAP_SIZE = 64                   # local map size M
GLOBAL_DOWNSCALING = 2          # ds
FRAME_H = FRAME_W = 16
EXPLORED_AREA_DILATION_RADIUS = 3   # config.AGENT.PLANNER.explored_area_dilation_radius
EXPLORED_AREA_EROSION_RADIUS = 0    # config.AGENT.PLANNER.explored_area_erosion_radius

C_MAP = NON_SEM_CHANNELS + NUM_SEM_CATEGORIES        # local/global map channels
C_MF = 2 * NON_SEM_CHANNELS + NUM_SEM_CATEGORIES     # map-feature channels


# -----------------------------------------------------------------------------
# Kernel 1: get_frontier_map -- runs once per unique map (B items), dilations
# on the MXU via band-matrix matmuls.
# -----------------------------------------------------------------------------
def _frontier_kernel(exp_ref, r2_ref, r3_ref, r1_ref, c2_ref, c3_ref, c1_ref,
                     out_ref):
    """exp_ref/out_ref: (PB*M, 2M) -- PB lane-packed map pairs stacked along
    sublanes.  Row-band matrices (PB*M, PB*M) are block-diagonal per pair,
    lane-band matrices (2M, 2M) block-diagonal per packed map, so image edges
    and the lane packing seam behave like conv zero-padding."""
    # explored_bin = 1 - (explored == 0); maps are binary, so > 0.5 is robust.
    x = (exp_ref[...] > 0.5).astype(jnp.float32)
    # binary_dilation(explored_bin, disk(3)):
    #   disk(3) footprint == rows[-2..2]xcols[-2..2]  U  rows{0}xcols[-3..3]
    #                        U  rows[-3..3]xcols{0}     (exact union)
    #   -> overlap-counted sum > 0 is the dilation.
    s = jnp.dot(r2_ref[...],
                jnp.dot(x, c2_ref[...], preferred_element_type=jnp.float32),
                preferred_element_type=jnp.float32)
    s = s + jnp.dot(x, c3_ref[...], preferred_element_type=jnp.float32)
    s = s + jnp.dot(r3_ref[...], x, preferred_element_type=jnp.float32)
    fe = (s < 0.5).astype(jnp.float32)        # 1 - dilated  (eroded unexplored area)
    # TODO(synk): explored-area erosion omitted (explored_area_erosion_radius == 0).
    # border select: binary_dilation(fe, disk(1)) - fe;  disk(1) = cross.
    s1 = (jnp.dot(r1_ref[...], fe, preferred_element_type=jnp.float32)
          + jnp.dot(fe, c1_ref[...], preferred_element_type=jnp.float32))
    out_ref[...] = (s1 > 0.5).astype(jnp.float32) - fe


# -----------------------------------------------------------------------------
# Kernel 2: reach_goal_if_in_map + explore_otherwise -- per (b, t) item,
# trivial VPU work on lane-packed (M, 2M) tiles.
# -----------------------------------------------------------------------------
def _goal_select_kernel(goalch_ref, frontier_ref, goal_ref, found_ref):
    pb, _, twom = goalch_ref.shape            # (PB, M, 2M)
    half = twom // 2
    # Original code tests (category_map == 1); maps are binary so > 0.5 is a
    # robust equivalent.
    goal_bin = (goalch_ref[...] > 0.5).astype(jnp.float32)
    # Reduce rows first (cheap), then split the lane halves per packed item.
    col_sum = jnp.sum(goal_bin, axis=1, keepdims=True)               # (PB, 1, 2M)
    lane = lax.broadcasted_iota(jnp.int32, col_sum.shape, 2)
    left = lane < half
    s_left = jnp.sum(jnp.where(left, col_sum, 0.0), axis=2, keepdims=True)
    s_right = jnp.sum(jnp.where(left, 0.0, col_sum), axis=2, keepdims=True)
    found_row = jnp.where(left, s_left, s_right)                     # (PB, 1, 2M)
    goal_ref[...] = jnp.where(found_row > 0.5, goal_bin, frontier_ref[...])
    found_ref[...] = found_row                                       # compact flag row


# -----------------------------------------------------------------------------
# Wrappers
# -----------------------------------------------------------------------------
def _band_matrix(n, block, radius):
    """(n, n) 0/1 band matrix: B[i, j] = 1 iff |i-j| <= radius and i, j lie in
    the same `block`-sized diagonal block (no mixing across maps / pack seam)."""
    idx = jnp.arange(n, dtype=jnp.int32)
    same_block = (idx[:, None] // block) == (idx[None, :] // block)
    in_band = jnp.abs(idx[:, None] - idx[None, :]) <= radius
    return (same_block & in_band).astype(jnp.float32)


def _pack_pairs(x, n_pairs_pad):
    """(N, M, M) -> (n_pairs_pad, M, 2M): lane-pack two maps per tile.
    Data volumes here are tiny after T-dedup, so the transpose cost is noise."""
    m = MAP_SIZE
    n = x.shape[0]
    n_pad = 2 * n_pairs_pad
    x = x.astype(jnp.float32)
    if n_pad > n:
        x = jnp.concatenate([x, jnp.zeros((n_pad - n, m, m), jnp.float32)], 0)
    return x.reshape(n_pairs_pad, 2, m, m).transpose(0, 2, 1, 3).reshape(
        n_pairs_pad, m, 2 * m)


def _unpack_pairs(x, n):
    """(P, M, 2M) -> (N, M, M) (first n items)."""
    m = MAP_SIZE
    p = x.shape[0]
    return x.reshape(p, m, 2, m).transpose(0, 2, 1, 3).reshape(2 * p, m, m)[:n]


def frontier_maps(explored_b, max_pairs_per_block=4):
    """get_frontier_map, one map per batch element.  (B, M, M) -> (B, M, M)."""
    assert EXPLORED_AREA_DILATION_RADIUS == 3 and EXPLORED_AREA_EROSION_RADIUS == 0
    m = MAP_SIZE
    b = explored_b.shape[0]
    n_pairs = -(-b // 2)
    pb = max(1, min(max_pairs_per_block, n_pairs))
    n_steps = -(-n_pairs // pb)
    n_pairs_pad = n_steps * pb

    packed = _pack_pairs(explored_b, n_pairs_pad)              # (P, M, 2M)
    x2 = packed.reshape(n_pairs_pad * m, 2 * m)                # pairs -> sublanes

    rows = pb * m
    r2 = _band_matrix(rows, m, 2)
    r3 = _band_matrix(rows, m, 3)
    r1 = _band_matrix(rows, m, 1)
    c2 = _band_matrix(2 * m, m, 2)
    c3 = _band_matrix(2 * m, m, 3)
    c1 = _band_matrix(2 * m, m, 1)

    tile = pl.BlockSpec((rows, 2 * m), lambda g: (g, 0))
    row_spec = pl.BlockSpec((rows, rows), lambda g: (0, 0))    # resident constants
    col_spec = pl.BlockSpec((2 * m, 2 * m), lambda g: (0, 0))

    frontier2 = pl.pallas_call(
        _frontier_kernel,
        out_shape=jax.ShapeDtypeStruct((n_pairs_pad * m, 2 * m), jnp.float32),
        grid=(n_steps,),
        in_specs=[tile, row_spec, row_spec, row_spec, col_spec, col_spec, col_spec],
        out_specs=tile,
        compiler_params=pltpu.CompilerParams(dimension_semantics=("parallel",)),
    )(x2, r2, r3, r1, c2, c3, c1)

    return _unpack_pairs(frontier2.reshape(n_pairs_pad, m, 2 * m), b)


def goal_select(goalch_n, frontier_n, max_pairs_per_block=8):
    """reach_goal_if_in_map + explore_otherwise for N policy items."""
    m = MAP_SIZE
    n = goalch_n.shape[0]
    n_pairs = -(-n // 2)
    if n_pairs <= 1:
        pb = 1
    else:
        # Keep >= 2 balanced grid steps so "parallel" can split across the two
        # TensorCores on v7x, while amortizing per-step grid overhead.
        pb = max(1, min(max_pairs_per_block, -(-n_pairs // 2)))
    n_steps = -(-n_pairs // pb)
    n_pairs_pad = n_steps * pb

    goalch_p = _pack_pairs(goalch_n, n_pairs_pad)
    frontier_p = _pack_pairs(frontier_n, n_pairs_pad)

    tile = pl.BlockSpec((pb, m, 2 * m), lambda g: (g, 0, 0))
    goal_p, found_p = pl.pallas_call(
        _goal_select_kernel,
        out_shape=(
            jax.ShapeDtypeStruct((n_pairs_pad, m, 2 * m), jnp.float32),
            jax.ShapeDtypeStruct((n_pairs_pad, 1, 2 * m), jnp.float32),
        ),
        grid=(n_steps,),
        in_specs=[tile, tile],
        out_specs=(tile, pl.BlockSpec((pb, 1, 2 * m), lambda g: (g, 0, 0))),
        compiler_params=pltpu.CompilerParams(dimension_semantics=("parallel",)),
    )(goalch_p, frontier_p)

    goal_map = _unpack_pairs(goal_p, n)
    found2 = found_p.reshape(n_pairs_pad, 2 * m)
    found = jnp.stack([found2[:, 0], found2[:, m]], axis=1).reshape(2 * n_pairs_pad)[:n]
    return goal_map, found > 0.5


def frontier_exploration_policy(map_features, object_goal_category, map_index):
    """ObjectNavFrontierExplorationPolicy forward (+ get_frontier_map).

    map_features: (B, C_MF, M, M)  -- one set of map features per unique map
    object_goal_category: (N,) int -- goal category per policy item
    map_index: (N,) int            -- which map each policy item uses
    Returns goal_map (N, M, M), found_goal (N,) bool, frontier_map (N, M, M).
    """
    chan = object_goal_category.astype(jnp.int32) + 2 * NON_SEM_CHANNELS
    map_index = map_index.astype(jnp.int32)
    mf = map_features.astype(jnp.float32)

    # Frontier dilation once per unique map (T-dedup).
    frontier_b = frontier_maps(mf[:, MC_EXPLORED_MAP])            # (B, M, M)

    # Gather just the goal channel (and per-item frontier) for the policy items.
    goalch_n = mf[map_index, chan]                                # (N, M, M)
    frontier_n = frontier_b[map_index]                            # (N, M, M)

    goal_map, found_goal = goal_select(goalch_n, frontier_n)
    return goal_map, found_goal, frontier_n


# -----------------------------------------------------------------------------
# Plain-JAX glue (semantic map module, simplified)
# -----------------------------------------------------------------------------
def _get_new_pose_batch(pose, rel_pose_change):
    deg = 57.29577951308232
    th = pose[:, 2] / deg
    y = pose[:, 1] + rel_pose_change[:, 0] * jnp.sin(th) + rel_pose_change[:, 1] * jnp.cos(th)
    x = pose[:, 0] + rel_pose_change[:, 0] * jnp.cos(th) - rel_pose_change[:, 1] * jnp.sin(th)
    o = pose[:, 2] + rel_pose_change[:, 2] * deg
    o = jnp.fmod(o - 180.0, 360.0) + 180.0
    o = jnp.fmod(o + 180.0, 360.0) - 180.0
    return jnp.stack([x, y, o], axis=1)


def _get_map_features(local_map, global_map):
    # Categorical2DSemanticMapModule._get_map_features:
    #   [local non-sem, MaxPool2d(ds)(global non-sem), local sem channels]
    B = local_map.shape[0]
    g = global_map[:, :NON_SEM_CHANNELS].reshape(
        B, NON_SEM_CHANNELS, MAP_SIZE, GLOBAL_DOWNSCALING, MAP_SIZE, GLOBAL_DOWNSCALING)
    pooled = g.max(axis=(3, 5))
    return jnp.concatenate(
        [local_map[:, :NON_SEM_CHANNELS], pooled, local_map[:, NON_SEM_CHANNELS:]], axis=1)


def objectnav_agent_forward(
    seq_obs, seq_pose_delta, seq_dones, seq_update_global, seq_camera_poses,
    init_local_map, init_global_map, init_local_pose, init_global_pose,
    init_lmb, init_origins, seq_object_goal_category=None,
):
    B, T = seq_obs.shape[:2]
    m = MAP_SIZE

    # ---- Categorical2DSemanticMapModule (simplified) -----------------------
    # TODO(synk): geometric depth->point-cloud->map splatting update, done-flag
    # episode resets and update_global recentering are not implemented; maps stay
    # at their initial values and only the pose chain is integrated.
    def pose_step(local_pose, delta_t):
        new_local = _get_new_pose_batch(local_pose, delta_t)
        new_global = new_local + init_origins
        return new_local, (new_local, new_global)

    _, (loc_seq, glob_seq) = jax.lax.scan(
        pose_step, init_local_pose, jnp.swapaxes(seq_pose_delta, 0, 1))
    seq_local_pose = jnp.swapaxes(loc_seq, 0, 1)
    seq_global_pose = jnp.swapaxes(glob_seq, 0, 1)
    seq_lmb = jnp.broadcast_to(init_lmb[:, None, :], (B, T) + init_lmb.shape[1:])
    seq_origins = jnp.broadcast_to(init_origins[:, None, :], (B, T, 3))
    final_local_map = init_local_map
    final_global_map = init_global_map

    # One set of map features per batch element (maps constant over T in the
    # simplified pipeline); the (B*T, C_MF, M, M) broadcast is never materialized.
    map_features = _get_map_features(init_local_map, init_global_map)   # (B, C_MF, M, M)

    # ---- ObjectNavFrontierExplorationPolicy (Pallas kernels) ---------------
    cat_flat = seq_object_goal_category.reshape(B * T)
    map_index = jnp.arange(B * T, dtype=jnp.int32) // T
    goal_map, found_goal, frontier_map = frontier_exploration_policy(
        map_features, cat_flat, map_index)

    seq_goal_map = goal_map.reshape(B, T, m, m)
    seq_found_goal = found_goal.reshape(B, T)
    seq_frontier_map = frontier_map.reshape(B, T, m, m)

    return (seq_goal_map, seq_found_goal, seq_frontier_map, final_local_map,
            final_global_map, seq_local_pose, seq_global_pose, seq_lmb, seq_origins)


# -----------------------------------------------------------------------------
# Pure-JAX reference of the policy path (for a correctness check in the demo)
# -----------------------------------------------------------------------------
def _dilate_ref(x, radius):
    r = radius
    mm = x.shape[-1]
    xp = jnp.pad(x, ((0, 0), (r, r), (r, r)))
    out = jnp.zeros_like(x)
    for dr in range(-r, r + 1):
        for dc in range(-r, r + 1):
            if dr * dr + dc * dc <= r * r:
                out = jnp.maximum(out, xp[:, r + dr:r + dr + mm, r + dc:r + dc + mm])
    return out


def _policy_ref(map_features, cat, map_index):
    explored = map_features[map_index, MC_EXPLORED_MAP]
    goalch = map_features[map_index, cat.astype(jnp.int32) + 2 * NON_SEM_CHANNELS]
    fr = (explored == 0).astype(jnp.float32)
    fr = 1.0 - _dilate_ref(1.0 - fr, EXPLORED_AREA_DILATION_RADIUS)
    frontier = _dilate_ref(fr, 1) - fr
    goal_bin = (goalch > 0.5).astype(jnp.float32)
    found = goal_bin.sum(axis=(1, 2)) > 0
    goal = jnp.where(found[:, None, None], goal_bin, frontier)
    return goal, found, frontier


# -----------------------------------------------------------------------------
# Demo
# -----------------------------------------------------------------------------
if __name__ == "__main__":
    key = jax.random.PRNGKey(0)
    B, T = 2, 2
    m = MAP_SIZE
    ks = jax.random.split(key, 6)
    c_obs = 3 + 1 + NUM_SEM_CATEGORIES + 1

    seq_obs = jax.random.uniform(ks[0], (B, T, c_obs, FRAME_H, FRAME_W), jnp.float32)
    seq_pose_delta = 0.1 * jax.random.normal(ks[1], (B, T, 3), jnp.float32)
    seq_dones = jnp.zeros((B, T), jnp.bool_)
    seq_update_global = jnp.ones((B, T), jnp.bool_)
    seq_camera_poses = jnp.broadcast_to(jnp.eye(4, dtype=jnp.float32), (B, 4, 4))

    init_local_map = (jax.random.uniform(
        ks[2], (B, C_MAP, MAP_SIZE, MAP_SIZE)) > 0.85).astype(jnp.float32)
    # zero batch element 1's goal-category channel so explore_otherwise is exercised
    init_local_map = init_local_map.at[1, NON_SEM_CHANNELS].set(0.0)
    init_global_map = (jax.random.uniform(
        ks[3], (B, C_MAP, MAP_SIZE * GLOBAL_DOWNSCALING, MAP_SIZE * GLOBAL_DOWNSCALING))
        > 0.85).astype(jnp.float32)
    init_local_pose = jnp.zeros((B, 3), jnp.float32)
    init_global_pose = jnp.zeros((B, 3), jnp.float32)
    init_lmb = jnp.broadcast_to(jnp.array([0, MAP_SIZE, 0, MAP_SIZE], jnp.int32), (B, 4))
    init_origins = jnp.zeros((B, 3), jnp.float32)
    seq_object_goal_category = jnp.zeros((B, T, 1), jnp.int32)   # goal category 0

    forward = jax.jit(objectnav_agent_forward)
    outs = forward(
        seq_obs, seq_pose_delta, seq_dones, seq_update_global, seq_camera_poses,
        init_local_map, init_global_map, init_local_pose, init_global_pose,
        init_lmb, init_origins, seq_object_goal_category)
    jax.block_until_ready(outs)

    # Correctness check of the Pallas policy path against a pure-JAX reference.
    seq_goal_map, seq_found_goal, seq_frontier_map = outs[0], outs[1], outs[2]
    mf = _get_map_features(init_local_map, init_global_map)
    map_index = jnp.arange(B * T, dtype=jnp.int32) // T
    goal_ref, found_ref, frontier_ref = _policy_ref(
        mf, seq_object_goal_category.reshape(B * T), map_index)
    assert bool(jnp.allclose(seq_goal_map.reshape(-1, m, m), goal_ref, atol=1e-5))
    assert bool(jnp.array_equal(seq_found_goal.reshape(-1), found_ref))
    assert bool(jnp.allclose(seq_frontier_map.reshape(-1, m, m), frontier_ref, atol=1e-5))

    print("KERNEL_OK")
</pallas_src>

<mosaic_0001>
module attributes {stable_mosaic.version = 11 : i64} {
  func.func @_frontier_kernel(%arg0: i32, %arg1: memref<64x128xf32, #tpu.memory_space<vmem>>, %arg2: memref<64x64xf32, #tpu.memory_space<vmem>>, %arg3: memref<64x64xf32, #tpu.memory_space<vmem>>, %arg4: memref<64x64xf32, #tpu.memory_space<vmem>>, %arg5: memref<128x128xf32, #tpu.memory_space<vmem>>, %arg6: memref<128x128xf32, #tpu.memory_space<vmem>>, %arg7: memref<128x128xf32, #tpu.memory_space<vmem>>, %arg8: memref<64x128xf32, #tpu.memory_space<vmem>>) attributes {dimension_semantics = [#tpu.dimension_semantics<parallel>], iteration_bounds = array<i64: 1>, scalar_prefetch = 0 : i64, scratch_operands = 0 : i64, tpu.core_type = #tpu.core_type<tc>, window_params = [{transform_indices = @transform_0, window_bounds = array<i64: 64, 128>}, {pipeline_mode = #tpu.pipeline_mode<synchronous>, transform_indices = @transform_1, window_bounds = array<i64: 64, 64>}, {pipeline_mode = #tpu.pipeline_mode<synchronous>, transform_indices = @transform_2, window_bounds = array<i64: 64, 64>}, {pipeline_mode = #tpu.pipeline_mode<synchronous>, transform_indices = @transform_3, window_bounds = array<i64: 64, 64>}, {pipeline_mode = #tpu.pipeline_mode<synchronous>, transform_indices = @transform_4, window_bounds = array<i64: 128, 128>}, {pipeline_mode = #tpu.pipeline_mode<synchronous>, transform_indices = @transform_5, window_bounds = array<i64: 128, 128>}, {pipeline_mode = #tpu.pipeline_mode<synchronous>, transform_indices = @transform_6, window_bounds = array<i64: 128, 128>}, {transform_indices = @transform_7, window_bounds = array<i64: 64, 128>}]} {
    %c0 = arith.constant 0 : index
    %c0_0 = arith.constant 0 : index
    %0 = vector.load %arg1[%c0, %c0_0] : memref<64x128xf32, #tpu.memory_space<vmem>>, vector<64x128xf32>
    %cst = arith.constant 5.000000e-01 : f32
    %1 = vector.broadcast %cst : f32 to vector<64x128xf32>
    %2 = arith.cmpf ogt, %0, %1 : vector<64x128xf32>
    %3 = arith.extui %2 : vector<64x128xi1> to vector<64x128xi32>
    %4 = arith.sitofp %3 : vector<64x128xi32> to vector<64x128xf32>
    %c0_1 = arith.constant 0 : index
    %c0_2 = arith.constant 0 : index
    %5 = vector.load %arg2[%c0_1, %c0_2] : memref<64x64xf32, #tpu.memory_space<vmem>>, vector<64x64xf32>
    %c0_3 = arith.constant 0 : index
    %c0_4 = arith.constant 0 : index
    %6 = vector.load %arg5[%c0_3, %c0_4] : memref<128x128xf32, #tpu.memory_space<vmem>>, vector<128x128xf32>
    %cst_5 = arith.constant dense<0.000000e+00> : vector<64x128xf32>
    %7 = tpu.matmul %4, %6, %cst_5 {dimension_numbers = #tpu.dot_dimension_numbers<[1], [0], [0], [1], [0, 0, 1, 1], [], []>} : vector<64x128xf32>, vector<128x128xf32>, vector<64x128xf32> -> vector<64x128xf32>
    %cst_6 = arith.constant dense<0.000000e+00> : vector<64x128xf32>
    %8 = tpu.matmul %5, %7, %cst_6 {dimension_numbers = #tpu.dot_dimension_numbers<[1], [0], [0], [1], [0, 0, 1, 1], [], []>} : vector<64x64xf32>, vector<64x128xf32>, vector<64x128xf32> -> vector<64x128xf32>
    %c0_7 = arith.constant 0 : index
    %c0_8 = arith.constant 0 : index
    %9 = vector.load %arg6[%c0_7, %c0_8] : memref<128x128xf32, #tpu.memory_space<vmem>>, vector<128x128xf32>
    %cst_9 = arith.constant dense<0.000000e+00> : vector<64x128xf32>
    %10 = tpu.matmul %4, %9, %cst_9 {dimension_numbers = #tpu.dot_dimension_numbers<[1], [0], [0], [1], [0, 0, 1, 1], [], []>} : vector<64x128xf32>, vector<128x128xf32>, vector<64x128xf32> -> vector<64x128xf32>
    %11 = arith.addf %8, %10 : vector<64x128xf32>
    %c0_10 = arith.constant 0 : index
    %c0_11 = arith.constant 0 : index
    %12 = vector.load %arg3[%c0_10, %c0_11] : memref<64x64xf32, #tpu.memory_space<vmem>>, vector<64x64xf32>
    %cst_12 = arith.constant dense<0.000000e+00> : vector<64x128xf32>
    %13 = tpu.matmul %12, %4, %cst_12 {dimension_numbers = #tpu.dot_dimension_numbers<[1], [0], [0], [1], [0, 0, 1, 1], [], []>} : vector<64x64xf32>, vector<64x128xf32>, vector<64x128xf32> -> vector<64x128xf32>
    %14 = arith.addf %11, %13 : vector<64x128xf32>
    %cst_13 = arith.constant 5.000000e-01 : f32
    %15 = vector.broadcast %cst_13 : f32 to vector<64x128xf32>
    %16 = arith.cmpf olt, %14, %15 : vector<64x128xf32>
    %17 = arith.extui %16 : vector<64x128xi1> to vector<64x128xi32>
    %18 = arith.sitofp %17 : vector<64x128xi32> to vector<64x128xf32>
    %c0_14 = arith.constant 0 : index
    %c0_15 = arith.constant 0 : index
    %19 = vector.load %arg4[%c0_14, %c0_15] : memref<64x64xf32, #tpu.memory_space<vmem>>, vector<64x64xf32>
    %cst_16 = arith.constant dense<0.000000e+00> : vector<64x128xf32>
    %20 = tpu.matmul %19, %18, %cst_16 {dimension_numbers = #tpu.dot_dimension_numbers<[1], [0], [0], [1], [0, 0, 1, 1], [], []>} : vector<64x64xf32>, vector<64x128xf32>, vector<64x128xf32> -> vector<64x128xf32>
    %c0_17 = arith.constant 0 : index
    %c0_18 = arith.constant 0 : index
    %21 = vector.load %arg7[%c0_17, %c0_18] : memref<128x128xf32, #tpu.memory_space<vmem>>, vector<128x128xf32>
    %cst_19 = arith.constant dense<0.000000e+00> : vector<64x128xf32>
    %22 = tpu.matmul %18, %21, %cst_19 {dimension_numbers = #tpu.dot_dimension_numbers<[1], [0], [0], [1], [0, 0, 1, 1], [], []>} : vector<64x128xf32>, vector<128x128xf32>, vector<64x128xf32> -> vector<64x128xf32>
    %23 = arith.addf %20, %22 : vector<64x128xf32>
    %cst_20 = arith.constant 5.000000e-01 : f32
    %24 = vector.broadcast %cst_20 : f32 to vector<64x128xf32>
    %25 = arith.cmpf ogt, %23, %24 : vector<64x128xf32>
    %26 = arith.extui %25 : vector<64x128xi1> to vector<64x128xi32>
    %27 = arith.sitofp %26 : vector<64x128xi32> to vector<64x128xf32>
    %28 = arith.subf %27, %18 : vector<64x128xf32>
    %c0_21 = arith.constant 0 : index
    %c0_22 = arith.constant 0 : index
    %29 = vector.load %arg8[%c0_21, %c0_22] : memref<64x128xf32, #tpu.memory_space<vmem>>, vector<64x128xf32>
    tpu.vector_store %arg8[%c0_21, %c0_22], %28 {strides = array<i32>} : memref<64x128xf32, #tpu.memory_space<vmem>>, vector<64x128xf32>,
    return
  }
  func.func @transform_0(%arg0: i32) -> (i32, i32) {
    %c0_i32 = arith.constant 0 : i32
    %c0_i32_0 = arith.constant 0 : i32
    return %arg0, %c0_i32 : i32, i32
  }
  func.func @transform_1(%arg0: i32) -> (i32, i32) {
    %c0_i32 = arith.constant 0 : i32
    %c0_i32_0 = arith.constant 0 : i32
    %c0_i32_1 = arith.constant 0 : i32
    return %c0_i32, %c0_i32_0 : i32, i32
  }
  func.func @transform_2(%arg0: i32) -> (i32, i32) {
    %c0_i32 = arith.constant 0 : i32
    %c0_i32_0 = arith.constant 0 : i32
    %c0_i32_1 = arith.constant 0 : i32
    return %c0_i32, %c0_i32_0 : i32, i32
  }
  func.func @transform_3(%arg0: i32) -> (i32, i32) {
    %c0_i32 = arith.constant 0 : i32
    %c0_i32_0 = arith.constant 0 : i32
    %c0_i32_1 = arith.constant 0 : i32
    return %c0_i32, %c0_i32_0 : i32, i32
  }
  func.func @transform_4(%arg0: i32) -> (i32, i32) {
    %c0_i32 = arith.constant 0 : i32
    %c0_i32_0 = arith.constant 0 : i32
    %c0_i32_1 = arith.constant 0 : i32
    return %c0_i32, %c0_i32_0 : i32, i32
  }
  func.func @transform_5(%arg0: i32) -> (i32, i32) {
    %c0_i32 = arith.constant 0 : i32
    %c0_i32_0 = arith.constant 0 : i32
    %c0_i32_1 = arith.constant 0 : i32
    return %c0_i32, %c0_i32_0 : i32, i32
  }
  func.func @transform_6(%arg0: i32) -> (i32, i32) {
    %c0_i32 = arith.constant 0 : i32
    %c0_i32_0 = arith.constant 0 : i32
    %c0_i32_1 = arith.constant 0 : i32
    return %c0_i32, %c0_i32_0 : i32, i32
  }
  func.func @transform_7(%arg0: i32) -> (i32, i32) {
    %c0_i32 = arith.constant 0 : i32
    %c0_i32_0 = arith.constant 0 : i32
    return %arg0, %c0_i32 : i32, i32
  }
}

module attributes {stable_mosaic.version = 11 : i64} {
  func.func @_goal_select_kernel(%arg0: i32, %arg1: memref<1x64x128xf32, #tpu.memory_space<vmem>>, %arg2: memref<1x64x128xf32, #tpu.memory_space<vmem>>, %arg3: memref<1x64x128xf32, #tpu.memory_space<vmem>>, %arg4: memref<1x1x128xf32, #tpu.memory_space<vmem>>) attributes {dimension_semantics = [#tpu.dimension_semantics<parallel>], iteration_bounds = array<i64: 2>, scalar_prefetch = 0 : i64, scratch_operands = 0 : i64, tpu.core_type = #tpu.core_type<tc>, window_params = [{transform_indices = @transform_0, window_bounds = array<i64: 1, 64, 128>}, {transform_indices = @transform_1, window_bounds = array<i64: 1, 64, 128>}, {transform_indices = @transform_2, window_bounds = array<i64: 1, 64, 128>}, {transform_indices = @transform_3, window_bounds = array<i64: 1, 1, 128>}]} {
    %c0 = arith.constant 0 : index
    %c0_0 = arith.constant 0 : index
    %c0_1 = arith.constant 0 : index
    %0 = vector.load %arg1[%c0, %c0_0, %c0_1] : memref<1x64x128xf32, #tpu.memory_space<vmem>>, vector<1x64x128xf32>
    %cst = arith.constant 5.000000e-01 : f32
    %1 = vector.broadcast %cst : f32 to vector<1x64x128xf32>
    %2 = arith.cmpf ogt, %0, %1 : vector<1x64x128xf32>
    %3 = arith.extui %2 : vector<1x64x128xi1> to vector<1x64x128xi32>
    %4 = arith.sitofp %3 : vector<1x64x128xi32> to vector<1x64x128xf32>
    %cst_2 = arith.constant dense<0.000000e+00> : vector<1x128xf32>
    %5 = vector.multi_reduction <add>, %4, %cst_2 [1] : vector<1x64x128xf32> to vector<1x128xf32>
    %6 = vector.shape_cast %5 : vector<1x128xf32> to vector<1x1x128xf32>
    %7 = tpu.iota {dimensions = array<i32: 2>} : vector<1x1x128xi32>
    %c64_i32 = arith.constant 64 : i32
    %8 = vector.broadcast %c64_i32 : i32 to vector<1x1x128xi32>
    %9 = arith.cmpi slt, %7, %8 : vector<1x1x128xi32>
    %cst_3 = arith.constant 0.000000e+00 : f32
    %10 = vector.broadcast %cst_3 : f32 to vector<1x1x128xf32>
    %11 = arith.select %9, %6, %10 : vector<1x1x128xi1>, vector<1x1x128xf32>
    %cst_4 = arith.constant dense<0.000000e+00> : vector<1x1xf32>
    %12 = vector.multi_reduction <add>, %11, %cst_4 [2] : vector<1x1x128xf32> to vector<1x1xf32>
    %13 = vector.shape_cast %12 : vector<1x1xf32> to vector<1x1x1xf32>
    %cst_5 = arith.constant 0.000000e+00 : f32
    %14 = vector.broadcast %cst_5 : f32 to vector<1x1x128xf32>
    %15 = arith.select %9, %14, %6 : vector<1x1x128xi1>, vector<1x1x128xf32>
    %cst_6 = arith.constant dense<0.000000e+00> : vector<1x1xf32>
    %16 = vector.multi_reduction <add>, %15, %cst_6 [2] : vector<1x1x128xf32> to vector<1x1xf32>
    %17 = vector.shape_cast %16 : vector<1x1xf32> to vector<1x1x1xf32>
    %18 = vector.shape_cast %13 : vector<1x1x1xf32> to vector<1x1x1xf32>
    %19 = vector.broadcast %18 : vector<1x1x1xf32> to vector<1x1x128xf32>
    %20 = vector.shape_cast %17 : vector<1x1x1xf32> to vector<1x1x1xf32>
    %21 = vector.broadcast %20 : vector<1x1x1xf32> to vector<1x1x128xf32>
    %22 = arith.select %9, %19, %21 : vector<1x1x128xi1>, vector<1x1x128xf32>
    %cst_7 = arith.constant 5.000000e-01 : f32
    %23 = vector.broadcast %cst_7 : f32 to vector<1x1x128xf32>
    %24 = arith.cmpf ogt, %22, %23 : vector<1x1x128xf32>
    %c0_8 = arith.constant 0 : index
    %c0_9 = arith.constant 0 : index
    %c0_10 = arith.constant 0 : index
    %25 = vector.load %arg2[%c0_8, %c0_9, %c0_10] : memref<1x64x128xf32, #tpu.memory_space<vmem>>, vector<1x64x128xf32>
    %26 = vector.shape_cast %24 : vector<1x1x128xi1> to vector<1x1x128xi1>
    %27 = vector.broadcast %26 : vector<1x1x128xi1> to vector<1x64x128xi1>
    %28 = arith.select %27, %4, %25 : vector<1x64x128xi1>, vector<1x64x128xf32>
    %c0_11 = arith.constant 0 : index
    %c0_12 = arith.constant 0 : index
    %c0_13 = arith.constant 0 : index
    %29 = vector.load %arg3[%c0_11, %c0_12, %c0_13] : memref<1x64x128xf32, #tpu.memory_space<vmem>>, vector<1x64x128xf32>
    tpu.vector_store %arg3[%c0_11, %c0_12, %c0_13], %28 {strides = array<i32>} : memref<1x64x128xf32, #tpu.memory_space<vmem>>, vector<1x64x128xf32>,
    %c0_14 = arith.constant 0 : index
    %c0_15 = arith.constant 0 : index
    %c0_16 = arith.constant 0 : index
    %30 = vector.load %arg4[%c0_14, %c0_15, %c0_16] : memref<1x1x128xf32, #tpu.memory_space<vmem>>, vector<1x1x128xf32>
    tpu.vector_store %arg4[%c0_14, %c0_15, %c0_16], %22 {strides = array<i32>} : memref<1x1x128xf32, #tpu.memory_space<vmem>>, vector<1x1x128xf32>,
    return
  }
  func.func @transform_0(%arg0: i32) -> (i32, i32, i32) {
    %c0_i32 = arith.constant 0 : i32
    %c0_i32_0 = arith.constant 0 : i32
    %c0_i32_1 = arith.constant 0 : i32
    return %arg0, %c0_i32, %c0_i32_0 : i32, i32, i32
  }
  func.func @transform_1(%arg0: i32) -> (i32, i32, i32) {
    %c0_i32 = arith.constant 0 : i32
    %c0_i32_0 = arith.constant 0 : i32
    %c0_i32_1 = arith.constant 0 : i32
    return %arg0, %c0_i32, %c0_i32_0 : i32, i32, i32
  }
  func.func @transform_2(%arg0: i32) -> (i32, i32, i32) {
    %c0_i32 = arith.constant 0 : i32
    %c0_i32_0 = arith.constant 0 : i32
    %c0_i32_1 = arith.constant 0 : i32
    return %arg0, %c0_i32, %c0_i32_0 : i32, i32, i32
  }
  func.func @transform_3(%arg0: i32) -> (i32, i32, i32) {
    %c0_i32 = arith.constant 0 : i32
    %c0_i32_0 = arith.constant 0 : i32
    %c0_i32_1 = arith.constant 0 : i32
    return %arg0, %c0_i32, %c0_i32_0 : i32, i32, i32
  }
}

</mosaic_0001>

<llo_original>
// kernel: objectnav_agent_forward.2
$region0: #{objectnav_agent_forward.2}
  #allocation0 [shape = 'u32[]', space=smem, size = 0x4, offset = 0x4, fixed_abs, tag = 'smem constant byte address 0x4 - core index']
  #allocation1 [shape = 'u32[144,128]{1,0:T(1,128)}', space=vmem, size = 0x12000, scoped, tag = 'internal scratch']
  %s0 = inlined_call_operand.vmem [shape: f32[64,128], index: 0, kind: input, shape index: {}]
  %s1 = inlined_call_operand.vmem [shape: f32[64,64], index: 1, kind: input, shape index: {}]
  %s2 = inlined_call_operand.vmem [shape: f32[64,64], index: 2, kind: input, shape index: {}]
  %s3 = inlined_call_operand.vmem [shape: f32[64,64], index: 3, kind: input, shape index: {}]
  %s4 = inlined_call_operand.vmem [shape: f32[128,128], index: 4, kind: input, shape index: {}]
  %s5 = inlined_call_operand.vmem [shape: f32[128,128], index: 5, kind: input, shape index: {}]
  %s6 = inlined_call_operand.vmem [shape: f32[128,128], index: 6, kind: input, shape index: {}]
  %s7 = inlined_call_operand.vmem [shape: f32[64,128], index: 7, kind: output, shape index: {}]
  %s8 = sld [smem:[#allocation0]]
  $region38: #{objectnav_agent_forward.2} parent=0
    _
  %s10 = ssub.s32 1, %s8
  %s11 = scalar_select 0, %s10, %s8
  // Predicated region
  $region2: #{objectnav_agent_forward.2} parent=0 // pred_check
    _
  $region3: #{objectnav_agent_forward.2} parent=0 // pred_check_branch
    %13 = sbr.rel (0) target = $region5
  $region4: #{objectnav_agent_forward.2} parent=0 // pred_region
    _
  $region5: #{objectnav_agent_forward.2} parent=0 // pred_fallthru
    _
  // Predicated region
  $region6: #{objectnav_agent_forward.2} parent=0 // pred_check
    _
  $region7: #{objectnav_agent_forward.2} parent=0 // pred_check_branch
    %15 = sbr.rel (0) target = $region9
  $region8: #{objectnav_agent_forward.2} parent=0 // pred_region
    _
  $region9: #{objectnav_agent_forward.2} parent=0 // pred_fallthru
    _
  // Predicated region
  $region10: #{objectnav_agent_forward.2} parent=0 // pred_check
    _
  $region11: #{objectnav_agent_forward.2} parent=0 // pred_check_branch
    %17 = sbr.rel (0) target = $region13
  $region12: #{objectnav_agent_forward.2} parent=0 // pred_region
    _
  $region13: #{objectnav_agent_forward.2} parent=0 // pred_fallthru
    _
  // Predicated region
  $region14: #{objectnav_agent_forward.2} parent=0 // pred_check
    _
  $region15: #{objectnav_agent_forward.2} parent=0 // pred_check_branch
    %19 = sbr.rel (0) target = $region17
  $region16: #{objectnav_agent_forward.2} parent=0 // pred_region
    _
  $region17: #{objectnav_agent_forward.2} parent=0 // pred_fallthru
    _
  // Predicated region
  $region18: #{objectnav_agent_forward.2} parent=0 // pred_check
    _
  $region19: #{objectnav_agent_forward.2} parent=0 // pred_check_branch
    %21 = sbr.rel (0) target = $region21
  $region20: #{objectnav_agent_forward.2} parent=0 // pred_region
    _
  $region21: #{objectnav_agent_forward.2} parent=0 // pred_fallthru
    _
  // Predicated region
  $region22: #{objectnav_agent_forward.2} parent=0 // pred_check
    _
  $region23: #{objectnav_agent_forward.2} parent=0 // pred_check_branch
    %23 = sbr.rel (0) target = $region25
  $region24: #{objectnav_agent_forward.2} parent=0 // pred_region
    _
  $region25: #{objectnav_agent_forward.2} parent=0 // pred_fallthru
    _
  // Predicated region
  $region26: #{objectnav_agent_forward.2} parent=0 // pred_check
    _
  $region27: #{objectnav_agent_forward.2} parent=0 // pred_check_branch
    %25 = sbr.rel (0) target = $region29
  $region28: #{objectnav_agent_forward.2} parent=0 // pred_region
    _
  $region29: #{objectnav_agent_forward.2} parent=0 // pred_fallthru
    _
  %v26 = vld [vmem:[%s0] sm:$0xff]
  %v27 = vld [vmem:[%s0 + $0x8] sm:$0xff]
  %v28 = vld [vmem:[%s0 + $0x10] sm:$0xff]
  %v29 = vld [vmem:[%s0 + $0x18] sm:$0xff]
  %v30 = vld [vmem:[%s0 + $0x20] sm:$0xff]
  %v31 = vld [vmem:[%s0 + $0x28] sm:$0xff]
  %v32 = vld [vmem:[%s0 + $0x30] sm:$0xff]
  %v33 = vld [vmem:[%s0 + $0x38] sm:$0xff]
  %vm34 = vcmp.gt.f32.partialorder %v26, 0.5
  %vm35 = vcmp.gt.f32.partialorder %v27, 0.5
  %vm36 = vcmp.gt.f32.partialorder %v28, 0.5
  %vm37 = vcmp.gt.f32.partialorder %v29, 0.5
  %vm38 = vcmp.gt.f32.partialorder %v30, 0.5
  %vm39 = vcmp.gt.f32.partialorder %v31, 0.5
  %vm40 = vcmp.gt.f32.partialorder %v32, 0.5
  %vm41 = vcmp.gt.f32.partialorder %v33, 0.5
  %v42 = vsel %vm34, 1, 0
  %v43 = vsel %vm35, 1, 0
  %v44 = vsel %vm36, 1, 0
  %v45 = vsel %vm37, 1, 0
  %v46 = vsel %vm38, 1, 0
  %v47 = vsel %vm39, 1, 0
  %v48 = vsel %vm40, 1, 0
  %v49 = vsel %vm41, 1, 0
  %v50 = vcvt.s32.f32 %v42
  %v51 = vcvt.s32.f32 %v43
  %v52 = vcvt.s32.f32 %v44
  %v53 = vcvt.s32.f32 %v45
  %v54 = vcvt.s32.f32 %v46
  %v55 = vcvt.s32.f32 %v47
  %v56 = vcvt.s32.f32 %v48
  %v57 = vcvt.s32.f32 %v49
  %v58 = vld [vmem:[%s1] sm:$0xff]
  %v59 = vld [vmem:[%s1 + $0x8] sm:$0xff]
  %v60 = vld [vmem:[%s1 + $0x10] sm:$0xff]
  %v61 = vld [vmem:[%s1 + $0x18] sm:$0xff]
  %v62 = vld [vmem:[%s1 + $0x20] sm:$0xff]
  %v63 = vld [vmem:[%s1 + $0x28] sm:$0xff]
  %v64 = vld [vmem:[%s1 + $0x30] sm:$0xff]
  %v65 = vld [vmem:[%s1 + $0x38] sm:$0xff]
  %v66 = vld [vmem:[%s4] sm:$0xff]
  %v67 = vld [vmem:[%s4 + $0x8] sm:$0xff]
  %v68 = vld [vmem:[%s4 + $0x10] sm:$0xff]
  %v69 = vld [vmem:[%s4 + $0x18] sm:$0xff]
  %v70 = vld [vmem:[%s4 + $0x20] sm:$0xff]
  %v71 = vld [vmem:[%s4 + $0x28] sm:$0xff]
  %v72 = vld [vmem:[%s4 + $0x30] sm:$0xff]
  %v73 = vld [vmem:[%s4 + $0x38] sm:$0xff]
  %v74 = vld [vmem:[%s4 + $0x40] sm:$0xff]
  %v75 = vld [vmem:[%s4 + $0x48] sm:$0xff]
  %v76 = vld [vmem:[%s4 + $0x50] sm:$0xff]
  %v77 = vld [vmem:[%s4 + $0x58] sm:$0xff]
  %v78 = vld [vmem:[%s4 + $0x60] sm:$0xff]
  %v79 = vld [vmem:[%s4 + $0x68] sm:$0xff]
  %v80 = vld [vmem:[%s4 + $0x70] sm:$0xff]
  %v81 = vld [vmem:[%s4 + $0x78] sm:$0xff]
  %82 = vmatprep.subr.mxu0 0.0
  %83 = vmatpush1.msra.mxu0 %v81
  %84 = vmatprep.subr.mxu0 0.0
  %85 = vmatpush1.msra.mxu0 %v80
  %86 = vmatprep.subr.mxu0 0.0
  %87 = vmatpush1.msra.mxu0 %v79
  %88 = vmatprep.subr.mxu0 0.0
  %89 = vmatpush1.msra.mxu0 %v78
  %90 = vmatprep.subr.mxu0 0.0
  %91 = vmatpush1.msra.mxu0 %v77
  %92 = vmatprep.subr.mxu0 0.0
  %93 = vmatpush1.msra.mxu0 %v76
  %94 = vmatprep.subr.mxu0 0.0
  %95 = vmatpush1.msra.mxu0 %v75
  %96 = vmatprep.subr.mxu0 0.0
  %97 = vmatpush1.msra.mxu0 %v74
  %98 = vmatprep.subr.mxu0 0.0
  %99 = vmatpush1.msra.mxu0 %v73
  %100 = vmatprep.subr.mxu0 0.0
  %101 = vmatpush1.msra.mxu0 %v72
  %102 = vmatprep.subr.mxu0 0.0
  %103 = vmatpush1.msra.mxu0 %v71
  %104 = vmatprep.subr.mxu0 0.0
  %105 = vmatpush1.msra.mxu0 %v70
  %106 = vmatprep.subr.mxu0 0.0
  %107 = vmatpush1.msra.mxu0 %v69
  %108 = vmatprep.subr.mxu0 0.0
  %109 = vmatpush1.msra.mxu0 %v68
  %110 = vmatprep.subr.mxu0 0.0
  %111 = vmatpush1.msra.mxu0 %v67
  %112 = vmatprep.subr.mxu0 0.0
  %113 = vmatpush1.msra.mxu0 %v66
  %114 = vmatprep.subr.mxu0 0.0
  %115 = vmatpush2.msra.mxu0 0.0
  %116 = vmatprep.subr.mxu0 0.0
  %117 = vmatpush2.msra.mxu0 0.0
  %118 = vmatprep.subr.mxu0 0.0
  %119 = vmatpush2.msra.mxu0 0.0
  %120 = vmatprep.subr.mxu0 0.0
  %121 = vmatpush2.msra.mxu0 0.0
  %122 = vmatprep.subr.mxu0 0.0
  %123 = vmatpush2.msra.mxu0 0.0
  %124 = vmatprep.subr.mxu0 0.0
  %125 = vmatpush2.msra.mxu0 0.0
  %126 = vmatprep.subr.mxu0 0.0
  %127 = vmatpush2.msra.mxu0 0.0
  %128 = vmatprep.subr.mxu0 0.0
  %129 = vmatpush2.msra.mxu0 0.0
  %130 = vmatprep.subr.mxu0 0.0
  %131 = vmatpush2.msra.mxu0 0.0
  %132 = vmatprep.subr.mxu0 0.0
  %133 = vmatpush2.msra.mxu0 0.0
  %134 = vmatprep.subr.mxu0 0.0
  %135 = vmatpush2.msra.mxu0 0.0
  %136 = vmatprep.subr.mxu0 0.0
  %137 = vmatpush2.msra.mxu0 0.0
  %138 = vmatprep.subr.mxu0 0.0
  %139 = vmatpush2.msra.mxu0 0.0
  %140 = vmatprep.subr.mxu0 0.0
  %141 = vmatpush2.msra.mxu0 0.0
  %142 = vmatprep.subr.mxu0 0.0
  %143 = vmatpush2.msra.mxu0 0.0
  %144 = vmatprep.subr.mxu0 0.0
  %145 = vmatpush2.msra.mxu0 0.0
  %146 = vmatprep.mubr.f32.mxu0 0.0
  %147 = vmatmul.mubr.f32.gmra.mxu0 %v50
  %v148 = vpop.f32.mrf.mxu0
  %v149 = vadd.f32 0.0, %v148
  %v150 = vpop.f32.mrf.mxu0
  %151 = vmatprep.mubr.f32.mxu0 0.0
  %152 = vmatmul.mubr.f32.gmra.mxu0 %v51
  %v153 = vpop.f32.mrf.mxu0
  %v154 = vadd.f32 0.0, %v153
  %v155 = vpop.f32.mrf.mxu0
  %156 = vmatprep.mubr.f32.mxu0 0.0
  %157 = vmatmul.mubr.f32.gmra.mxu0 %v52
  %v158 = vpop.f32.mrf.mxu0
  %v159 = vadd.f32 0.0, %v158
  %v160 = vpop.f32.mrf.mxu0
  %161 = vmatprep.mubr.f32.mxu0 0.0
  %162 = vmatmul.mubr.f32.gmra.mxu0 %v53
  %v163 = vpop.f32.mrf.mxu0
  %v164 = vadd.f32 0.0, %v163
  %v165 = vpop.f32.mrf.mxu0
  %166 = vmatprep.mubr.f32.mxu0 0.0
  %167 = vmatmul.mubr.f32.gmra.mxu0 %v54
  %v168 = vpop.f32.mrf.mxu0
  %v169 = vadd.f32 0.0, %v168
  %v170 = vpop.f32.mrf.mxu0
  %171 = vmatprep.mubr.f32.mxu0 0.0
  %172 = vmatmul.mubr.f32.gmra.mxu0 %v55
  %v173 = vpop.f32.mrf.mxu0
  %v174 = vadd.f32 0.0, %v173
  %v175 = vpop.f32.mrf.mxu0
  %176 = vmatprep.mubr.f32.mxu0 0.0
  %177 = vmatmul.mubr.f32.gmra.mxu0 %v56
  %v178 = vpop.f32.mrf.mxu0
  %v179 = vadd.f32 0.0, %v178
  %v180 = vpop.f32.mrf.mxu0
  %181 = vmatprep.mubr.f32.mxu0 0.0
  %182 = vmatmul.mubr.f32.gmra.mxu0 %v57
  %v183 = vpop.f32.mrf.mxu0
  %v184 = vadd.f32 0.0, %v183
  %v185 = vpop.f32.mrf.mxu0
  %186 = vdwg.mxu0
  %v187 = vld [vmem:[%s5] sm:$0xff]
  %v188 = vld [vmem:[%s5 + $0x8] sm:$0xff]
  %v189 = vld [vmem:[%s5 + $0x10] sm:$0xff]
  %v190 = vld [vmem:[%s5 + $0x18] sm:$0xff]
  %v191 = vld [vmem:[%s5 + $0x20] sm:$0xff]
  %v192 = vld [vmem:[%s5 + $0x28] sm:$0xff]
  %v193 = vld [vmem:[%s5 + $0x30] sm:$0xff]
  %v194 = vld [vmem:[%s5 + $0x38] sm:$0xff]
  %v195 = vld [vmem:[%s5 + $0x40] sm:$0xff]
  %v196 = vld [vmem:[%s5 + $0x48] sm:$0xff]
  %v197 = vld [vmem:[%s5 + $0x50] sm:$0xff]
  %v198 = vld [vmem:[%s5 + $0x58] sm:$0xff]
  %v199 = vld [vmem:[%s5 + $0x60] sm:$0xff]
  %v200 = vld [vmem:[%s5 + $0x68] sm:$0xff]
  %v201 = vld [vmem:[%s5 + $0x70] sm:$0xff]
  %v202 = vld [vmem:[%s5 + $0x78] sm:$0xff]
  %203 = vmatprep.subr.mxu0 0.0
  %204 = vmatpush1.msra.mxu0 %v202
  %205 = vmatprep.subr.mxu0 0.0
  %206 = vmatpush1.msra.mxu0 %v201
  %207 = vmatprep.subr.mxu0 0.0
  %208 = vmatpush1.msra.mxu0 %v200
  %209 = vmatprep.subr.mxu0 0.0
  %210 = vmatpush1.msra.mxu0 %v199
  %211 = vmatprep.subr.mxu0 0.0
  %212 = vmatpush1.msra.mxu0 %v198
  %213 = vmatprep.subr.mxu0 0.0
  %214 = vmatpush1.msra.mxu0 %v197
  %215 = vmatprep.subr.mxu0 0.0
  %216 = vmatpush1.msra.mxu0 %v196
  %217 = vmatprep.subr.mxu0 0.0
  %218 = vmatpush1.msra.mxu0 %v195
  %219 = vmatprep.subr.mxu0 0.0
  %220 = vmatpush1.msra.mxu0 %v194
  %221 = vmatprep.subr.mxu0 0.0
  %222 = vmatpush1.msra.mxu0 %v193
  %223 = vmatprep.subr.mxu0 0.0
  %224 = vmatpush1.msra.mxu0 %v192
  %225 = vmatprep.subr.mxu0 0.0
  %226 = vmatpush1.msra.mxu0 %v191
  %227 = vmatprep.subr.mxu0 0.0
  %228 = vmatpush1.msra.mxu0 %v190
  %229 = vmatprep.subr.mxu0 0.0
  %230 = vmatpush1.msra.mxu0 %v189
  %231 = vmatprep.subr.mxu0 0.0
  %232 = vmatpush1.msra.mxu0 %v188
  %233 = vmatprep.subr.mxu0 0.0
  %234 = vmatpush1.msra.mxu0 %v187
  %235 = vmatprep.subr.mxu0 0.0
  %236 = vmatpush2.msra.mxu0 0.0
  %237 = vmatprep.subr.mxu0 0.0
  %238 = vmatpush2.msra.mxu0 0.0
  %239 = vmatprep.subr.mxu0 0.0
  %240 = vmatpush2.msra.mxu0 0.0
  %241 = vmatprep.subr.mxu0 0.0
  %242 = vmatpush2.msra.mxu0 0.0
  %243 = vmatprep.subr.mxu0 0.0
  %244 = vmatpush2.msra.mxu0 0.0
  %245 = vmatprep.subr.mxu0 0.0
  %246 = vmatpush2.msra.mxu0 0.0
  %247 = vmatprep.subr.mxu0 0.0
  %248 = vmatpush2.msra.mxu0 0.0
  %249 = vmatprep.subr.mxu0 0.0
  %250 = vmatpush2.msra.mxu0 0.0
  %251 = vmatprep.subr.mxu0 0.0
  %252 = vmatpush2.msra.mxu0 0.0
  %253 = vmatprep.subr.mxu0 0.0
  %254 = vmatpush2.msra.mxu0 0.0
  %255 = vmatprep.subr.mxu0 0.0
  %256 = vmatpush2.msra.mxu0 0.0
  %257 = vmatprep.subr.mxu0 0.0
  %258 = vmatpush2.msra.mxu0 0.0
  %259 = vmatprep.subr.mxu0 0.0
  %260 = vmatpush2.msra.mxu0 0.0
  %261 = vmatprep.subr.mxu0 0.0
  %262 = vmatpush2.msra.mxu0 0.0
  %263 = vmatprep.subr.mxu0 0.0
  %264 = vmatpush2.msra.mxu0 0.0
  %265 = vmatprep.subr.mxu0 0.0
  %266 = vmatpush2.msra.mxu0 0.0
  %267 = vmatprep.mubr.f32.mxu0 0.0
  %268 = vmatmul.mubr.f32.gmra.mxu0 %v50
  %v269 = vpop.f32.mrf.mxu0
  %v270 = vadd.f32 0.0, %v269
  %v271 = vpop.f32.mrf.mxu0
  %272 = vmatprep.mubr.f32.mxu0 0.0
  %273 = vmatmul.mubr.f32.gmra.mxu0 %v51
  %v274 = vpop.f32.mrf.mxu0
  %v275 = vadd.f32 0.0, %v274
  %v276 = vpop.f32.mrf.mxu0
  %277 = vmatprep.mubr.f32.mxu0 0.0
  %278 = vmatmul.mubr.f32.gmra.mxu0 %v52
  %v279 = vpop.f32.mrf.mxu0
  %v280 = vadd.f32 0.0, %v279
  %v281 = vpop.f32.mrf.mxu0
  %282 = vmatprep.mubr.f32.mxu0 0.0
  %283 = vmatmul.mubr.f32.gmra.mxu0 %v53
  %v284 = vpop.f32.mrf.mxu0
  %v285 = vadd.f32 0.0, %v284
  %v286 = vpop.f32.mrf.mxu0
  %287 = vmatprep.mubr.f32.mxu0 0.0
  %288 = vmatmul.mubr.f32.gmra.mxu0 %v54
  %v289 = vpop.f32.mrf.mxu0
  %v290 = vadd.f32 0.0, %v289
  %v291 = vpop.f32.mrf.mxu0
  %292 = vmatprep.mubr.f32.mxu0 0.0
  %293 = vmatmul.mubr.f32.gmra.mxu0 %v55
  %v294 = vpop.f32.mrf.mxu0
  %v295 = vadd.f32 0.0, %v294
  %v296 = vpop.f32.mrf.mxu0
  %297 = vmatprep.mubr.f32.mxu0 0.0
  %298 = vmatmul.mubr.f32.gmra.mxu0 %v56
  %v299 = vpop.f32.mrf.mxu0
  %v300 = vadd.f32 0.0, %v299
  %v301 = vpop.f32.mrf.mxu0
  %302 = vmatprep.mubr.f32.mxu0 0.0
  %303 = vmatmul.mubr.f32.gmra.mxu0 %v57
  %v304 = vpop.f32.mrf.mxu0
  %v305 = vadd.f32 0.0, %v304
  %v306 = vpop.f32.mrf.mxu0
  %307 = vdwg.mxu0
  %vm308 = vcmask 523264
  %v310 = vsel %vm308, %v58, 0
  %v313 = vsel %vm308, %v59, 0
  %v316 = vsel %vm308, %v60, 0
  %v319 = vsel %vm308, %v61, 0
  %v322 = vsel %vm308, %v62, 0
  %v325 = vsel %vm308, %v63, 0
  %v328 = vsel %vm308, %v64, 0
  %v331 = vsel %vm308, %v65, 0
  %333 = vmatprep.subr.mxu0 0.0
  %334 = vmatpush1.msra.mxu0 0.0
  %335 = vmatprep.subr.mxu0 0.0
  %336 = vmatpush1.msra.mxu0 0.0
  %337 = vmatprep.subr.mxu0 0.0
  %338 = vmatpush1.msra.mxu0 0.0
  %339 = vmatprep.subr.mxu0 0.0
  %340 = vmatpush1.msra.mxu0 0.0
  %341 = vmatprep.subr.mxu0 0.0
  %342 = vmatpush1.msra.mxu0 0.0
  %343 = vmatprep.subr.mxu0 0.0
  %344 = vmatpush1.msra.mxu0 0.0
  %345 = vmatprep.subr.mxu0 0.0
  %346 = vmatpush1.msra.mxu0 0.0
  %347 = vmatprep.subr.mxu0 0.0
  %348 = vmatpush1.msra.mxu0 0.0
  %349 = vmatprep.subr.mxu0 0.0
  %350 = vmatpush1.msra.mxu0 %v184
  %351 = vmatprep.subr.mxu0 0.0
  %352 = vmatpush1.msra.mxu0 %v179
  %353 = vmatprep.subr.mxu0 0.0
  %354 = vmatpush1.msra.mxu0 %v174
  %355 = vmatprep.subr.mxu0 0.0
  %356 = vmatpush1.msra.mxu0 %v169
  %357 = vmatprep.subr.mxu0 0.0
  %358 = vmatpush1.msra.mxu0 %v164
  %359 = vmatprep.subr.mxu0 0.0
  %360 = vmatpush1.msra.mxu0 %v159
  %361 = vmatprep.subr.mxu0 0.0
  %362 = vmatpush1.msra.mxu0 %v154
  %363 = vmatprep.subr.mxu0 0.0
  %364 = vmatpush1.msra.mxu0 %v149
  %365 = vmatprep.subr.mxu0 0.0
  %366 = vmatpush2.msra.mxu0 0.0
  %367 = vmatprep.subr.mxu0 0.0
  %368 = vmatpush2.msra.mxu0 0.0
  %369 = vmatprep.subr.mxu0 0.0
  %370 = vmatpush2.msra.mxu0 0.0
  %371 = vmatprep.subr.mxu0 0.0
  %372 = vmatpush2.msra.mxu0 0.0
  %373 = vmatprep.subr.mxu0 0.0
  %374 = vmatpush2.msra.mxu0 0.0
  %375 = vmatprep.subr.mxu0 0.0
  %376 = vmatpush2.msra.mxu0 0.0
  %377 = vmatprep.subr.mxu0 0.0
  %378 = vmatpush2.msra.mxu0 0.0
  %379 = vmatprep.subr.mxu0 0.0
  %380 = vmatpush2.msra.mxu0 0.0
  %381 = vmatprep.subr.mxu0 0.0
  %382 = vmatpush2.msra.mxu0 0.0
  %383 = vmatprep.subr.mxu0 0.0
  %384 = vmatpush2.msra.mxu0 0.0
  %385 = vmatprep.subr.mxu0 0.0
  %386 = vmatpush2.msra.mxu0 0.0
  %387 = vmatprep.subr.mxu0 0.0
  %388 = vmatpush2.msra.mxu0 0.0
  %389 = vmatprep.subr.mxu0 0.0
  %390 = vmatpush2.msra.mxu0 0.0
  %391 = vmatprep.subr.mxu0 0.0
  %392 = vmatpush2.msra.mxu0 0.0
  %393 = vmatprep.subr.mxu0 0.0
  %394 = vmatpush2.msra.mxu0 0.0
  %395 = vmatprep.subr.mxu0 0.0
  %396 = vmatpush2.msra.mxu0 0.0
  %397 = vmatprep.mubr.f32.mxu0 0.0
  %398 = vmatmul.mubr.f32.gmra.mxu0 %v310
  %v399 = vpop.f32.mrf.mxu0
  %v400 = vadd.f32 %v270, %v399
  %v401 = vpop.f32.mrf.mxu0
  %402 = vmatprep.mubr.f32.mxu0 0.0
  %403 = vmatmul.mubr.f32.gmra.mxu0 %v313
  %v404 = vpop.f32.mrf.mxu0
  %v405 = vadd.f32 %v275, %v404
  %v406 = vpop.f32.mrf.mxu0
  %407 = vmatprep.mubr.f32.mxu0 0.0
  %408 = vmatmul.mubr.f32.gmra.mxu0 %v316
  %v409 = vpop.f32.mrf.mxu0
  %v410 = vadd.f32 %v280, %v409
  %v411 = vpop.f32.mrf.mxu0
  %412 = vmatprep.mubr.f32.mxu0 0.0
  %413 = vmatmul.mubr.f32.gmra.mxu0 %v319
  %v414 = vpop.f32.mrf.mxu0
  %v415 = vadd.f32 %v285, %v414
  %v416 = vpop.f32.mrf.mxu0
  %417 = vmatprep.mubr.f32.mxu0 0.0
  %418 = vmatmul.mubr.f32.gmra.mxu0 %v322
  %v419 = vpop.f32.mrf.mxu0
  %v420 = vadd.f32 %v290, %v419
  %v421 = vpop.f32.mrf.mxu0
  %422 = vmatprep.mubr.f32.mxu0 0.0
  %423 = vmatmul.mubr.f32.gmra.mxu0 %v325
  %v424 = vpop.f32.mrf.mxu0
  %v425 = vadd.f32 %v295, %v424
  %v426 = vpop.f32.mrf.mxu0
  %427 = vmatprep.mubr.f32.mxu0 0.0
  %428 = vmatmul.mubr.f32.gmra.mxu0 %v328
  %v429 = vpop.f32.mrf.mxu0
  %v430 = vadd.f32 %v300, %v429
  %v431 = vpop.f32.mrf.mxu0
  %432 = vmatprep.mubr.f32.mxu0 0.0
  %433 = vmatmul.mubr.f32.gmra.mxu0 %v331
  %v434 = vpop.f32.mrf.mxu0
  %v435 = vadd.f32 %v305, %v434
  %v436 = vpop.f32.mrf.mxu0
  %437 = vdwg.mxu0
  %v438 = vld [vmem:[%s2] sm:$0xff]
  %v439 = vld [vmem:[%s2 + $0x8] sm:$0xff]
  %v440 = vld [vmem:[%s2 + $0x10] sm:$0xff]
  %v441 = vld [vmem:[%s2 + $0x18] sm:$0xff]
  %v442 = vld [vmem:[%s2 + $0x20] sm:$0xff]
  %v443 = vld [vmem:[%s2 + $0x28] sm:$0xff]
  %v444 = vld [vmem:[%s2 + $0x30] sm:$0xff]
  %v445 = vld [vmem:[%s2 + $0x38] sm:$0xff]
  %v447 = vsel %vm308, %v438, 0
  %v450 = vsel %vm308, %v439, 0
  %v453 = vsel %vm308, %v440, 0
  %v456 = vsel %vm308, %v441, 0
  %v459 = vsel %vm308, %v442, 0
  %v462 = vsel %vm308, %v443, 0
  %v465 = vsel %vm308, %v444, 0
  %v468 = vsel %vm308, %v445, 0
  %470 = vmatprep.subr.mxu0 0.0
  %471 = vmatpush1.msra.mxu0 0.0
  %472 = vmatprep.subr.mxu0 0.0
  %473 = vmatpush1.msra.mxu0 0.0
  %474 = vmatprep.subr.mxu0 0.0
  %475 = vmatpush1.msra.mxu0 0.0
  %476 = vmatprep.subr.mxu0 0.0
  %477 = vmatpush1.msra.mxu0 0.0
  %478 = vmatprep.subr.mxu0 0.0
  %479 = vmatpush1.msra.mxu0 0.0
  %480 = vmatprep.subr.mxu0 0.0
  %481 = vmatpush1.msra.mxu0 0.0
  %482 = vmatprep.subr.mxu0 0.0
  %483 = vmatpush1.msra.mxu0 0.0
  %484 = vmatprep.subr.mxu0 0.0
  %485 = vmatpush1.msra.mxu0 0.0
  %486 = vmatprep.subr.mxu0 0.0
  %487 = vmatpush1.msra.mxu0 %v57
  %488 = vmatprep.subr.mxu0 0.0
  %489 = vmatpush1.msra.mxu0 %v56
  %490 = vmatprep.subr.mxu0 0.0
  %491 = vmatpush1.msra.mxu0 %v55
  %492 = vmatprep.subr.mxu0 0.0
  %493 = vmatpush1.msra.mxu0 %v54
  %494 = vmatprep.subr.mxu0 0.0
  %495 = vmatpush1.msra.mxu0 %v53
  %496 = vmatprep.subr.mxu0 0.0
  %497 = vmatpush1.msra.mxu0 %v52
  %498 = vmatprep.subr.mxu0 0.0
  %499 = vmatpush1.msra.mxu0 %v51
  %500 = vmatprep.subr.mxu0 0.0
  %501 = vmatpush1.msra.mxu0 %v50
  %502 = vmatprep.subr.mxu0 0.0
  %503 = vmatpush2.msra.mxu0 0.0
  %504 = vmatprep.subr.mxu0 0.0
  %505 = vmatpush2.msra.mxu0 0.0
  %506 = vmatprep.subr.mxu0 0.0
  %507 = vmatpush2.msra.mxu0 0.0
  %508 = vmatprep.subr.mxu0 0.0
  %509 = vmatpush2.msra.mxu0 0.0
  %510 = vmatprep.subr.mxu0 0.0
  %511 = vmatpush2.msra.mxu0 0.0
  %512 = vmatprep.subr.mxu0 0.0
  %513 = vmatpush2.msra.mxu0 0.0
  %514 = vmatprep.subr.mxu0 0.0
  %515 = vmatpush2.msra.mxu0 0.0
  %516 = vmatprep.subr.mxu0 0.0
  %517 = vmatpush2.msra.mxu0 0.0
  %518 = vmatprep.subr.mxu0 0.0
  %519 = vmatpush2.msra.mxu0 0.0
  %520 = vmatprep.subr.mxu0 0.0
  %521 = vmatpush2.msra.mxu0 0.0
  %522 = vmatprep.subr.mxu0 0.0
  %523 = vmatpush2.msra.mxu0 0.0
  %524 = vmatprep.subr.mxu0 0.0
  %525 = vmatpush2.msra.mxu0 0.0
  %526 = vmatprep.subr.mxu0 0.0
  %527 = vmatpush2.msra.mxu0 0.0
  %528 = vmatprep.subr.mxu0 0.0
  %529 = vmatpush2.msra.mxu0 0.0
  %530 = vmatprep.subr.mxu0 0.0
  %531 = vmatpush2.msra.mxu0 0.0
  %532 = vmatprep.subr.mxu0 0.0
  %533 = vmatpush2.msra.mxu0 0.0
  %534 = vmatprep.mubr.f32.mxu0 0.0
  %535 = vmatmul.mubr.f32.gmra.mxu0 %v447
  %v536 = vpop.f32.mrf.mxu0
  %v537 = vadd.f32 0.0, %v536
  %v538 = vpop.f32.mrf.mxu0
  %539 = vmatprep.mubr.f32.mxu0 0.0
  %540 = vmatmul.mubr.f32.gmra.mxu0 %v450
  %v541 = vpop.f32.mrf.mxu0
  %v542 = vadd.f32 0.0, %v541
  %v543 = vpop.f32.mrf.mxu0
  %544 = vmatprep.mubr.f32.mxu0 0.0
  %545 = vmatmul.mubr.f32.gmra.mxu0 %v453
  %v546 = vpop.f32.mrf.mxu0
  %v547 = vadd.f32 0.0, %v546
  %v548 = vpop.f32.mrf.mxu0
  %549 = vmatprep.mubr.f32.mxu0 0.0
  %550 = vmatmul.mubr.f32.gmra.mxu0 %v456
  %v551 = vpop.f32.mrf.mxu0
  %v552 = vadd.f32 0.0, %v551
  %v553 = vpop.f32.mrf.mxu0
  %554 = vmatprep.mubr.f32.mxu0 0.0
  %555 = vmatmul.mubr.f32.gmra.mxu0 %v459
  %v556 = vpop.f32.mrf.mxu0
  %v557 = vadd.f32 0.0, %v556
  %v558 = vpop.f32.mrf.mxu0
  %559 = vmatprep.mubr.f32.mxu0 0.0
  %560 = vmatmul.mubr.f32.gmra.mxu0 %v462
  %v561 = vpop.f32.mrf.mxu0
  %v562 = vadd.f32 0.0, %v561
  %v563 = vpop.f32.mrf.mxu0
  %564 = vmatprep.mubr.f32.mxu0 0.0
  %565 = vmatmul.mubr.f32.gmra.mxu0 %v465
  %v566 = vpop.f32.mrf.mxu0
  %v567 = vadd.f32 0.0, %v566
  %v568 = vpop.f32.mrf.mxu0
  %569 = vmatprep.mubr.f32.mxu0 0.0
  %570 = vmatmul.mubr.f32.gmra.mxu0 %v468
  %v571 = vpop.f32.mrf.mxu0
  %v572 = vadd.f32 0.0, %v571
  %v573 = vpop.f32.mrf.mxu0
  %574 = vdwg.mxu0
  %v575 = vadd.f32 %v400, %v537
  %v576 = vadd.f32 %v405, %v542
  %v577 = vadd.f32 %v410, %v547
  %v578 = vadd.f32 %v415, %v552
  %v579 = vadd.f32 %v420, %v557
  %v580 = vadd.f32 %v425, %v562
  %v581 = vadd.f32 %v430, %v567
  %v582 = vadd.f32 %v435, %v572
  %vm583 = vcmp.lt.f32.partialorder %v575, 0.5
  %vm584 = vcmp.lt.f32.partialorder %v576, 0.5
  %vm585 = vcmp.lt.f32.partialorder %v577, 0.5
  %vm586 = vcmp.lt.f32.partialorder %v578, 0.5
  %vm587 = vcmp.lt.f32.partialorder %v579, 0.5
  %vm588 = vcmp.lt.f32.partialorder %v580, 0.5
  %vm589 = vcmp.lt.f32.partialorder %v581, 0.5
  %vm590 = vcmp.lt.f32.partialorder %v582, 0.5
  %v591 = vsel %vm583, 1, 0
  %v592 = vsel %vm584, 1, 0
  %v593 = vsel %vm585, 1, 0
  %v594 = vsel %vm586, 1, 0
  %v595 = vsel %vm587, 1, 0
  %v596 = vsel %vm588, 1, 0
  %v597 = vsel %vm589, 1, 0
  %v598 = vsel %vm590, 1, 0
  %v599 = vcvt.s32.f32 %v591
  %v600 = vcvt.s32.f32 %v592
  %v601 = vcvt.s32.f32 %v593
  %v602 = vcvt.s32.f32 %v594
  %v603 = vcvt.s32.f32 %v595
  %v604 = vcvt.s32.f32 %v596
  %v605 = vcvt.s32.f32 %v597
  %v606 = vcvt.s32.f32 %v598
  %v607 = vld [vmem:[%s3] sm:$0xff]
  %v608 = vld [vmem:[%s3 + $0x8] sm:$0xff]
  %v609 = vld [vmem:[%s3 + $0x10] sm:$0xff]
  %v610 = vld [vmem:[%s3 + $0x18] sm:$0xff]
  %v611 = vld [vmem:[%s3 + $0x20] sm:$0xff]
  %v612 = vld [vmem:[%s3 + $0x28] sm:$0xff]
  %v613 = vld [vmem:[%s3 + $0x30] sm:$0xff]
  %v614 = vld [vmem:[%s3 + $0x38] sm:$0xff]
  %v615 = vld [vmem:[%s6] sm:$0xff]
  %v616 = vld [vmem:[%s6 + $0x8] sm:$0xff]
  %v617 = vld [vmem:[%s6 + $0x10] sm:$0xff]
  %v618 = vld [vmem:[%s6 + $0x18] sm:$0xff]
  %v619 = vld [vmem:[%s6 + $0x20] sm:$0xff]
  %v620 = vld [vmem:[%s6 + $0x28] sm:$0xff]
  %v621 = vld [vmem:[%s6 + $0x30] sm:$0xff]
  %v622 = vld [vmem:[%s6 + $0x38] sm:$0xff]
  %v623 = vld [vmem:[%s6 + $0x40] sm:$0xff]
  %v624 = vld [vmem:[%s6 + $0x48] sm:$0xff]
  %v625 = vld [vmem:[%s6 + $0x50] sm:$0xff]
  %v626 = vld [vmem:[%s6 + $0x58] sm:$0xff]
  %v627 = vld [vmem:[%s6 + $0x60] sm:$0xff]
  %v628 = vld [vmem:[%s6 + $0x68] sm:$0xff]
  %v629 = vld [vmem:[%s6 + $0x70] sm:$0xff]
  %v630 = vld [vmem:[%s6 + $0x78] sm:$0xff]
  %631 = vmatprep.subr.mxu0 0.0
  %632 = vmatpush1.msra.mxu0 %v630
  %633 = vmatprep.subr.mxu0 0.0
  %634 = vmatpush1.msra.mxu0 %v629
  %635 = vmatprep.subr.mxu0 0.0
  %636 = vmatpush1.msra.mxu0 %v628
  %637 = vmatprep.subr.mxu0 0.0
  %638 = vmatpush1.msra.mxu0 %v627
  %639 = vmatprep.subr.mxu0 0.0
  %640 = vmatpush1.msra.mxu0 %v626
  %641 = vmatprep.subr.mxu0 0.0
  %642 = vmatpush1.msra.mxu0 %v625
  %643 = vmatprep.subr.mxu0 0.0
  %644 = vmatpush1.msra.mxu0 %v624
  %645 = vmatprep.subr.mxu0 0.0
  %646 = vmatpush1.msra.mxu0 %v623
  %647 = vmatprep.subr.mxu0 0.0
  %648 = vmatpush1.msra.mxu0 %v622
  %649 = vmatprep.subr.mxu0 0.0
  %650 = vmatpush1.msra.mxu0 %v621
  %651 = vmatprep.subr.mxu0 0.0
  %652 = vmatpush1.msra.mxu0 %v620
  %653 = vmatprep.subr.mxu0 0.0
  %654 = vmatpush1.msra.mxu0 %v619
  %655 = vmatprep.subr.mxu0 0.0
  %656 = vmatpush1.msra.mxu0 %v618
  %657 = vmatprep.subr.mxu0 0.0
  %658 = vmatpush1.msra.mxu0 %v617
  %659 = vmatprep.subr.mxu0 0.0
  %660 = vmatpush1.msra.mxu0 %v616
  %661 = vmatprep.subr.mxu0 0.0
  %662 = vmatpush1.msra.mxu0 %v615
  %663 = vmatprep.subr.mxu0 0.0
  %664 = vmatpush2.msra.mxu0 0.0
  %665 = vmatprep.subr.mxu0 0.0
  %666 = vmatpush2.msra.mxu0 0.0
  %667 = vmatprep.subr.mxu0 0.0
  %668 = vmatpush2.msra.mxu0 0.0
  %669 = vmatprep.subr.mxu0 0.0
  %670 = vmatpush2.msra.mxu0 0.0
  %671 = vmatprep.subr.mxu0 0.0
  %672 = vmatpush2.msra.mxu0 0.0
  %673 = vmatprep.subr.mxu0 0.0
  %674 = vmatpush2.msra.mxu0 0.0
  %675 = vmatprep.subr.mxu0 0.0
  %676 = vmatpush2.msra.mxu0 0.0
  %677 = vmatprep.subr.mxu0 0.0
  %678 = vmatpush2.msra.mxu0 0.0
  %679 = vmatprep.subr.mxu0 0.0
  %680 = vmatpush2.msra.mxu0 0.0
  %681 = vmatprep.subr.mxu0 0.0
  %682 = vmatpush2.msra.mxu0 0.0
  %683 = vmatprep.subr.mxu0 0.0
  %684 = vmatpush2.msra.mxu0 0.0
  %685 = vmatprep.subr.mxu0 0.0
  %686 = vmatpush2.msra.mxu0 0.0
  %687 = vmatprep.subr.mxu0 0.0
  %688 = vmatpush2.msra.mxu0 0.0
  %689 = vmatprep.subr.mxu0 0.0
  %690 = vmatpush2.msra.mxu0 0.0
  %691 = vmatprep.subr.mxu0 0.0
  %692 = vmatpush2.msra.mxu0 0.0
  %693 = vmatprep.subr.mxu0 0.0
  %694 = vmatpush2.msra.mxu0 0.0
  %695 = vmatprep.mubr.f32.mxu0 0.0
  %696 = vmatmul.mubr.f32.gmra.mxu0 %v599
  %v697 = vpop.f32.mrf.mxu0
  %v698 = vadd.f32 0.0, %v697
  %v699 = vpop.f32.mrf.mxu0
  %700 = vmatprep.mubr.f32.mxu0 0.0
  %701 = vmatmul.mubr.f32.gmra.mxu0 %v600
  %v702 = vpop.f32.mrf.mxu0
  %v703 = vadd.f32 0.0, %v702
  %v704 = vpop.f32.mrf.mxu0
  %705 = vmatprep.mubr.f32.mxu0 0.0
  %706 = vmatmul.mubr.f32.gmra.mxu0 %v601
  %v707 = vpop.f32.mrf.mxu0
  %v708 = vadd.f32 0.0, %v707
  %v709 = vpop.f32.mrf.mxu0
  %710 = vmatprep.mubr.f32.mxu0 0.0
  %711 = vmatmul.mubr.f32.gmra.mxu0 %v602
  %v712 = vpop.f32.mrf.mxu0
  %v713 = vadd.f32 0.0, %v712
  %v714 = vpop.f32.mrf.mxu0
  %715 = vmatprep.mubr.f32.mxu0 0.0
  %716 = vmatmul.mubr.f32.gmra.mxu0 %v603
  %v717 = vpop.f32.mrf.mxu0
  %v718 = vadd.f32 0.0, %v717
  %v719 = vpop.f32.mrf.mxu0
  %720 = vmatprep.mubr.f32.mxu0 0.0
  %721 = vmatmul.mubr.f32.gmra.mxu0 %v604
  %v722 = vpop.f32.mrf.mxu0
  %v723 = vadd.f32 0.0, %v722
  %v724 = vpop.f32.mrf.mxu0
  %725 = vmatprep.mubr.f32.mxu0 0.0
  %726 = vmatmul.mubr.f32.gmra.mxu0 %v605
  %v727 = vpop.f32.mrf.mxu0
  %v728 = vadd.f32 0.0, %v727
  %v729 = vpop.f32.mrf.mxu0
  %730 = vmatprep.mubr.f32.mxu0 0.0
  %731 = vmatmul.mubr.f32.gmra.mxu0 %v606
  %v732 = vpop.f32.mrf.mxu0
  %v733 = vadd.f32 0.0, %v732
  %v734 = vpop.f32.mrf.mxu0
  %735 = vdwg.mxu0
  %v737 = vsel %vm308, %v607, 0
  %v740 = vsel %vm308, %v608, 0
  %v743 = vsel %vm308, %v609, 0
  %v746 = vsel %vm308, %v610, 0
  %v749 = vsel %vm308, %v611, 0
  %v752 = vsel %vm308, %v612, 0
  %v755 = vsel %vm308, %v613, 0
  %v758 = vsel %vm308, %v614, 0
  %760 = vmatprep.subr.mxu0 0.0
  %761 = vmatpush1.msra.mxu0 0.0
  %762 = vmatprep.subr.mxu0 0.0
  %763 = vmatpush1.msra.mxu0 0.0
  %764 = vmatprep.subr.mxu0 0.0
  %765 = vmatpush1.msra.mxu0 0.0
  %766 = vmatprep.subr.mxu0 0.0
  %767 = vmatpush1.msra.mxu0 0.0
  %768 = vmatprep.subr.mxu0 0.0
  %769 = vmatpush1.msra.mxu0 0.0
  %770 = vmatprep.subr.mxu0 0.0
  %771 = vmatpush1.msra.mxu0 0.0
  %772 = vmatprep.subr.mxu0 0.0
  %773 = vmatpush1.msra.mxu0 0.0
  %774 = vmatprep.subr.mxu0 0.0
  %775 = vmatpush1.msra.mxu0 0.0
  %776 = vmatprep.subr.mxu0 0.0
  %777 = vmatpush1.msra.mxu0 %v606
  %778 = vmatprep.subr.mxu0 0.0
  %779 = vmatpush1.msra.mxu0 %v605
  %780 = vmatprep.subr.mxu0 0.0
  %781 = vmatpush1.msra.mxu0 %v604
  %782 = vmatprep.subr.mxu0 0.0
  %783 = vmatpush1.msra.mxu0 %v603
  %784 = vmatprep.subr.mxu0 0.0
  %785 = vmatpush1.msra.mxu0 %v602
  %786 = vmatprep.subr.mxu0 0.0
  %787 = vmatpush1.msra.mxu0 %v601
  %788 = vmatprep.subr.mxu0 0.0
  %789 = vmatpush1.msra.mxu0 %v600
  %790 = vmatprep.subr.mxu0 0.0
  %791 = vmatpush1.msra.mxu0 %v599
  %792 = vmatprep.subr.mxu0 0.0
  %793 = vmatpush2.msra.mxu0 0.0
  %794 = vmatprep.subr.mxu0 0.0
  %795 = vmatpush2.msra.mxu0 0.0
  %796 = vmatprep.subr.mxu0 0.0
  %797 = vmatpush2.msra.mxu0 0.0
  %798 = vmatprep.subr.mxu0 0.0
  %799 = vmatpush2.msra.mxu0 0.0
  %800 = vmatprep.subr.mxu0 0.0
  %801 = vmatpush2.msra.mxu0 0.0
  %802 = vmatprep.subr.mxu0 0.0
  %803 = vmatpush2.msra.mxu0 0.0
  %804 = vmatprep.subr.mxu0 0.0
  %805 = vmatpush2.msra.mxu0 0.0
  %806 = vmatprep.subr.mxu0 0.0
  %807 = vmatpush2.msra.mxu0 0.0
  %808 = vmatprep.subr.mxu0 0.0
  %809 = vmatpush2.msra.mxu0 0.0
  %810 = vmatprep.subr.mxu0 0.0
  %811 = vmatpush2.msra.mxu0 0.0
  %812 = vmatprep.subr.mxu0 0.0
  %813 = vmatpush2.msra.mxu0 0.0
  %814 = vmatprep.subr.mxu0 0.0
  %815 = vmatpush2.msra.mxu0 0.0
  %816 = vmatprep.subr.mxu0 0.0
  %817 = vmatpush2.msra.mxu0 0.0
  %818 = vmatprep.subr.mxu0 0.0
  %819 = vmatpush2.msra.mxu0 0.0
  %820 = vmatprep.subr.mxu0 0.0
  %821 = vmatpush2.msra.mxu0 0.0
  %822 = vmatprep.subr.mxu0 0.0
  %823 = vmatpush2.msra.mxu0 0.0
  %824 = vmatprep.mubr.f32.mxu0 0.0
  %825 = vmatmul.mubr.f32.gmra.mxu0 %v737
  %v826 = vpop.f32.mrf.mxu0
  %v827 = vadd.f32 %v698, %v826
  %v828 = vpop.f32.mrf.mxu0
  %829 = vmatprep.mubr.f32.mxu0 0.0
  %830 = vmatmul.mubr.f32.gmra.mxu0 %v740
  %v831 = vpop.f32.mrf.mxu0
  %v832 = vadd.f32 %v703, %v831
  %v833 = vpop.f32.mrf.mxu0
  %834 = vmatprep.mubr.f32.mxu0 0.0
  %835 = vmatmul.mubr.f32.gmra.mxu0 %v743
  %v836 = vpop.f32.mrf.mxu0
  %v837 = vadd.f32 %v708, %v836
  %v838 = vpop.f32.mrf.mxu0
  %839 = vmatprep.mubr.f32.mxu0 0.0
  %840 = vmatmul.mubr.f32.gmra.mxu0 %v746
  %v841 = vpop.f32.mrf.mxu0
  %v842 = vadd.f32 %v713, %v841
  %v843 = vpop.f32.mrf.mxu0
  %844 = vmatprep.mubr.f32.mxu0 0.0
  %845 = vmatmul.mubr.f32.gmra.mxu0 %v749
  %v846 = vpop.f32.mrf.mxu0
  %v847 = vadd.f32 %v718, %v846
  %v848 = vpop.f32.mrf.mxu0
  %849 = vmatprep.mubr.f32.mxu0 0.0
  %850 = vmatmul.mubr.f32.gmra.mxu0 %v752
  %v851 = vpop.f32.mrf.mxu0
  %v852 = vadd.f32 %v723, %v851
  %v853 = vpop.f32.mrf.mxu0
  %854 = vmatprep.mubr.f32.mxu0 0.0
  %855 = vmatmul.mubr.f32.gmra.mxu0 %v755
  %v856 = vpop.f32.mrf.mxu0
  %v857 = vadd.f32 %v728, %v856
  %v858 = vpop.f32.mrf.mxu0
  %859 = vmatprep.mubr.f32.mxu0 0.0
  %860 = vmatmul.mubr.f32.gmra.mxu0 %v758
  %v861 = vpop.f32.mrf.mxu0
  %v862 = vadd.f32 %v733, %v861
  %v863 = vpop.f32.mrf.mxu0
  %864 = vdwg.mxu0
  %vm865 = vcmp.gt.f32.partialorder %v827, 0.5
  %vm866 = vcmp.gt.f32.partialorder %v832, 0.5
  %vm867 = vcmp.gt.f32.partialorder %v837, 0.5
  %vm868 = vcmp.gt.f32.partialorder %v842, 0.5
  %vm869 = vcmp.gt.f32.partialorder %v847, 0.5
  %vm870 = vcmp.gt.f32.partialorder %v852, 0.5
  %vm871 = vcmp.gt.f32.partialorder %v857, 0.5
  %vm872 = vcmp.gt.f32.partialorder %v862, 0.5
  %v873 = vsel %vm865, 1, 0
  %v874 = vsel %vm866, 1, 0
  %v875 = vsel %vm867, 1, 0
  %v876 = vsel %vm868, 1, 0
  %v877 = vsel %vm869, 1, 0
  %v878 = vsel %vm870, 1, 0
  %v879 = vsel %vm871, 1, 0
  %v880 = vsel %vm872, 1, 0
  %v881 = vcvt.s32.f32 %v873
  %v882 = vcvt.s32.f32 %v874
  %v883 = vcvt.s32.f32 %v875
  %v884 = vcvt.s32.f32 %v876
  %v885 = vcvt.s32.f32 %v877
  %v886 = vcvt.s32.f32 %v878
  %v887 = vcvt.s32.f32 %v879
  %v888 = vcvt.s32.f32 %v880
  %v889 = vsub.f32 %v881, %v599
  %v890 = vsub.f32 %v882, %v600
  %v891 = vsub.f32 %v883, %v601
  %v892 = vsub.f32 %v884, %v602
  %v893 = vsub.f32 %v885, %v603
  %v894 = vsub.f32 %v886, %v604
  %v895 = vsub.f32 %v887, %v605
  %v896 = vsub.f32 %v888, %v606
  %897 = vst [vmem:[%s7] sm:$0xff] %v889
  %898 = vst [vmem:[%s7 + $0x8] sm:$0xff] %v890
  %899 = vst [vmem:[%s7 + $0x10] sm:$0xff] %v891
  %900 = vst [vmem:[%s7 + $0x18] sm:$0xff] %v892
  %901 = vst [vmem:[%s7 + $0x20] sm:$0xff] %v893
  %902 = vst [vmem:[%s7 + $0x28] sm:$0xff] %v894
  %903 = vst [vmem:[%s7 + $0x30] sm:$0xff] %v895
  %904 = vst [vmem:[%s7 + $0x38] sm:$0xff] %v896
  // Predicated region
  $region30: #{objectnav_agent_forward.2} parent=0 // pred_check
    _
  $region31: #{objectnav_agent_forward.2} parent=0 // pred_check_branch
    %906 = sbr.rel (0) target = $region33
  $region32: #{objectnav_agent_forward.2} parent=0 // pred_region
    _
  $region33: #{objectnav_agent_forward.2} parent=0 // pred_fallthru
    _
  // Predicated region
  $region34: #{objectnav_agent_forward.2} parent=0 // pred_check
    _
  $region35: #{objectnav_agent_forward.2} parent=0 // pred_check_branch
    %908 = sbr.rel (0) target = $region37
  $region36: #{objectnav_agent_forward.2} parent=0 // pred_region
    _
  $region37: #{objectnav_agent_forward.2} parent=0 // pred_fallthru
    _

// kernel: objectnav_agent_forward.3
$region0: #{objectnav_agent_forward.3}
  #allocation0 [shape = 'u32[]', space=smem, size = 0x4, offset = 0x4, fixed_abs, tag = 'smem constant byte address 0x4 - core index']
  #allocation1 [shape = 'u32[144,128]{1,0:T(1,128)}', space=vmem, size = 0x12000, scoped, tag = 'internal scratch']
  %s0 = inlined_call_operand.vmem [shape: f32[2,64,128], index: 0, kind: input, shape index: {}]
  %s1 = inlined_call_operand.vmem [shape: f32[2,64,128], index: 1, kind: input, shape index: {}]
  %s2 = inlined_call_operand.vmem [shape: f32[2,64,128], index: 2, kind: output, shape index: {0}]
  %s3 = inlined_call_operand.vmem [shape: f32[2,1,128], index: 3, kind: output, shape index: {1}]
  %4 = xla_tuple %s2, %s3
  %s5 = sld [smem:[#allocation0]]
  $region49: #{objectnav_agent_forward.3} parent=0
    _
  %s7 = ssub.s32 1, %s5
  %s8 = scalar_select 0, %s7, %s5
  loop: start=0, step=1, limit=4
  $region2: #{objectnav_agent_forward.3} parent=0 // loop_pre_header
    _
  $region3: #{objectnav_agent_forward.3} parent=0 // loop_header
    %s10 = sphi 0, %s14
    %p11 = scmp.ge.s32.totalorder %s10, 4
    %s20 = sphi 0, %s22
    %s23 = sphi 0, %s20
    %s24 = sphi 0, %s23
    %s40 = sphi 0, %s24
    %s46 = sphi 0, %s48
    %s49 = sphi 0, %s46
    %s50 = sphi 0, %s49
    %s66 = sphi 0, %s50
    %s72 = sphi 0, %s74
    %s75 = sphi 0, %s72
    %s76 = sphi 0, %s75
    %s92 = sphi 0, %s76
    %s98 = sphi 0, %s100
    %s101 = sphi 0, %s98
    %s102 = sphi 0, %s101
    %s118 = sphi 0, %s102
  $region4: #{objectnav_agent_forward.3} parent=0 // loop_header_branch
    %13 = sbr.rel (%p11) target = $region8
  $region5: #{objectnav_agent_forward.3} parent=0 // loop_body
    %s15 = ssub.s32 %s10, 1
    %s16 = ssub.s32 %s10, 2
    %s17 = sadd.s32 %s10, 1
    %s18 = ssub.s32 %s10, %s17
    %p19 = scmp.eq.s32.totalorder %s18, 0
    %s21 = sadd.s32 %s20, 1
    %s22 = scalar_select %p19, %s20, %s21
    %p25 = pneg %p19
    %p26 = scmp.eq.s32.totalorder %s10, 1
    %p27 = por %p25, %p26
    %p28 = scmp.ne.s32.totalorder %s20, %s23
    %p29 = scmp.eq.s32.totalorder %s10, 0
    %p30 = por %p28, %p29
    %p31 = scmp.ne.s32.totalorder %s20, %s23
    %p32 = scmp.eq.s32.totalorder %s15, 1
    %p33 = por %p31, %p32
    %p34 = scmp.ne.s32.totalorder %s23, %s24
    %p35 = scmp.eq.s32.totalorder %s15, 0
    %p36 = por %p34, %p35
    %p37 = scmp.ne.s32.totalorder %s23, %s24
    %p38 = scmp.eq.s32.totalorder %s16, 1
    %p39 = por %p37, %p38
    %p41 = scmp.ne.s32.totalorder %s24, %s40
    %p42 = scmp.eq.s32.totalorder %s16, 0
    %p43 = por %p41, %p42
    %s44 = ssub.s32 %s10, %s17
    %p45 = scmp.eq.s32.totalorder %s44, 0
    %s47 = sadd.s32 %s46, 1
    %s48 = scalar_select %p45, %s46, %s47
    %p51 = pneg %p45
    %p52 = scmp.eq.s32.totalorder %s10, 1
    %p53 = por %p51, %p52
    %p54 = scmp.ne.s32.totalorder %s46, %s49
    %p55 = scmp.eq.s32.totalorder %s10, 0
    %p56 = por %p54, %p55
    %p57 = scmp.ne.s32.totalorder %s46, %s49
    %p58 = scmp.eq.s32.totalorder %s15, 1
    %p59 = por %p57, %p58
    %p60 = scmp.ne.s32.totalorder %s49, %s50
    %p61 = scmp.eq.s32.totalorder %s15, 0
    %p62 = por %p60, %p61
    %p63 = scmp.ne.s32.totalorder %s49, %s50
    %p64 = scmp.eq.s32.totalorder %s16, 1
    %p65 = por %p63, %p64
    %p67 = scmp.ne.s32.totalorder %s50, %s66
    %p68 = scmp.eq.s32.totalorder %s16, 0
    %p69 = por %p67, %p68
    %s70 = ssub.s32 %s10, %s17
    %p71 = scmp.eq.s32.totalorder %s70, 0
    %s73 = sadd.s32 %s72, 1
    %s74 = scalar_select %p71, %s72, %s73
    %p77 = pneg %p71
    %p78 = scmp.eq.s32.totalorder %s10, 1
    %p79 = por %p77, %p78
    %p80 = scmp.ne.s32.totalorder %s72, %s75
    %p81 = scmp.eq.s32.totalorder %s10, 0
    %p82 = por %p80, %p81
    %p83 = scmp.ne.s32.totalorder %s72, %s75
    %p84 = scmp.eq.s32.totalorder %s15, 1
    %p85 = por %p83, %p84
    %p86 = scmp.ne.s32.totalorder %s75, %s76
    %p87 = scmp.eq.s32.totalorder %s15, 0
    %p88 = por %p86, %p87
    %p89 = scmp.ne.s32.totalorder %s75, %s76
    %p90 = scmp.eq.s32.totalorder %s16, 1
    %p91 = por %p89, %p90
    %p93 = scmp.ne.s32.totalorder %s76, %s92
    %p94 = scmp.eq.s32.totalorder %s16, 0
    %p95 = por %p93, %p94
    %s96 = ssub.s32 %s10, %s17
    %p97 = scmp.eq.s32.totalorder %s96, 0
    %s99 = sadd.s32 %s98, 1
    %s100 = scalar_select %p97, %s98, %s99
    %p103 = pneg %p97
    %p104 = scmp.eq.s32.totalorder %s10, 1
    %p105 = por %p103, %p104
    %p106 = scmp.ne.s32.totalorder %s98, %s101
    %p107 = scmp.eq.s32.totalorder %s10, 0
    %p108 = por %p106, %p107
    %p109 = scmp.ne.s32.totalorder %s98, %s101
    %p110 = scmp.eq.s32.totalorder %s15, 1
    %p111 = por %p109, %p110
    %p112 = scmp.ne.s32.totalorder %s101, %s102
    %p113 = scmp.eq.s32.totalorder %s15, 0
    %p114 = por %p112, %p113
    %p115 = scmp.ne.s32.totalorder %s101, %s102
    %p116 = scmp.eq.s32.totalorder %s16, 1
    %p117 = por %p115, %p116
    %p119 = scmp.ne.s32.totalorder %s102, %s118
    %p120 = scmp.eq.s32.totalorder %s16, 0
    %p121 = por %p119, %p120
    %p122 = scmp.le.s32.totalorder 1, %s10
    %p123 = scmp.lt.s32.totalorder %s10, 3
    %p124 = pnand %p122, %p123
    %p125 = pneg %p124
    // Predicated region
    $region9: #{objectnav_agent_forward.3} parent=5 // pred_check
      _
    $region10: #{objectnav_agent_forward.3} parent=5 // pred_check_branch
      %127 = sbr.rel (%p124) target = $region12
    $region11: #{objectnav_agent_forward.3} parent=5 // pred_region
      %s128 = ssub.s32 %s10, 1
    $region12: #{objectnav_agent_forward.3} parent=5 // pred_fallthru
      _
    %p129 = scmp.lt.s32.totalorder %s10, 2
    // Predicated region
    $region13: #{objectnav_agent_forward.3} parent=5 // pred_check
      %p130 = pneg %p129
    $region14: #{objectnav_agent_forward.3} parent=5 // pred_check_branch
      %132 = sbr.rel (%p130) target = $region16
    $region15: #{objectnav_agent_forward.3} parent=5 // pred_region
      // Predicated region
      $region17: #{objectnav_agent_forward.3} parent=15 // pred_check
        %p133 = pneg %p30
      $region18: #{objectnav_agent_forward.3} parent=15 // pred_check_branch
        %135 = sbr.rel (%p133) target = $region20
      $region19: #{objectnav_agent_forward.3} parent=15 // pred_region
        %p136 = scmp.lt.s32.totalorder %s10, 1
        %s137 = scalar_select %p136, %s10, 1
        %s138 = smul.addr %s137, 8
        %s139 = smul.addr %s138, 8
        %s140 = scalar_lea.vmem %s0, %s139
      $region20: #{objectnav_agent_forward.3} parent=15 // pred_fallthru
        _
      // Predicated region
      $region21: #{objectnav_agent_forward.3} parent=15 // pred_check
        %p141 = pneg %p56
      $region22: #{objectnav_agent_forward.3} parent=15 // pred_check_branch
        %143 = sbr.rel (%p141) target = $region24
      $region23: #{objectnav_agent_forward.3} parent=15 // pred_region
        %p144 = scmp.lt.s32.totalorder %s10, 1
        %s145 = scalar_select %p144, %s10, 1
        %s146 = smul.addr %s145, 8
        %s147 = smul.addr %s146, 8
        %s148 = scalar_lea.vmem %s1, %s147
      $region24: #{objectnav_agent_forward.3} parent=15 // pred_fallthru
        _
    $region16: #{objectnav_agent_forward.3} parent=5 // pred_fallthru
      _
    %p149 = scmp.le.s32.totalorder 1, %s10
    %p150 = scmp.lt.s32.totalorder %s10, 3
    %p151 = pnand %p149, %p150
    %p152 = pneg %p151
    // Predicated region
    $region25: #{objectnav_agent_forward.3} parent=5 // pred_check
      _
    $region26: #{objectnav_agent_forward.3} parent=5 // pred_check_branch
      %154 = sbr.rel (%p151) target = $region28
    $region27: #{objectnav_agent_forward.3} parent=5 // pred_region
      %s155 = ssub.s32 %s10, 1
      %p156 = scmp.lt.s32.totalorder %s15, 1
      %s157 = scalar_select %p156, %s15, 1
      %s158 = smul.addr %s157, 8
      %s159 = smul.addr %s158, 8
      %s160 = scalar_lea.vmem %s0, %s159
      %p161 = pneg %p36
      %p162 = pneg %p33
      %p163 = scmp.lt.s32.totalorder %s15, 1
      %s164 = scalar_select %p163, %s15, 1
      %s165 = smul.addr %s164, 8
      %s166 = smul.addr %s165, 8
      %s167 = scalar_lea.vmem %s1, %s166
      %p168 = pneg %p62
      %p169 = pneg %p59
      %p170 = pneg %p88
      %p171 = pneg %p85
      %p172 = scmp.lt.s32.totalorder %s15, 1
      %s173 = scalar_select %p172, %s15, 1
      %s174 = smul.addr %s173, 8
      %s175 = smul.addr %s174, 8
      %s176 = scalar_lea.vmem %s2, %s175
      %p177 = pneg %p114
      %p178 = pneg %p111
      %p179 = scmp.lt.s32.totalorder %s15, 1
      %s180 = scalar_select %p179, %s15, 1
      %s181 = scalar_lea.vmem %s3, %s180
      %p182 = scmp.lt.s32.totalorder %s15, 1
      %s183 = scalar_select %p182, %s15, 1
      %s184 = smul.addr %s183, 8
      %s185 = smul.addr %s184, 8
      %s186 = scalar_lea.vmem %s0, %s185
      %p187 = scmp.lt.s32.totalorder %s15, 1
      %s188 = scalar_select %p187, %s15, 1
      %s189 = smul.addr %s188, 8
      %s190 = smul.addr %s189, 8
      %s191 = scalar_lea.vmem %s1, %s190
      %p192 = scmp.lt.s32.totalorder %s15, 1
      %s193 = scalar_select %p192, %s15, 1
      %s194 = smul.addr %s193, 8
      %s195 = smul.addr %s194, 8
      %s196 = scalar_lea.vmem %s2, %s195
      %p197 = scmp.lt.s32.totalorder %s15, 1
      %s198 = scalar_select %p197, %s15, 1
      %s199 = scalar_lea.vmem %s3, %s198
      %v200 = vld [vmem:[%s186] sm:$0xff]
      %v201 = vld [vmem:[%s186 + $0x8] sm:$0xff]
      %v202 = vld [vmem:[%s186 + $0x10] sm:$0xff]
      %v203 = vld [vmem:[%s186 + $0x18] sm:$0xff]
      %v204 = vld [vmem:[%s186 + $0x20] sm:$0xff]
      %v205 = vld [vmem:[%s186 + $0x28] sm:$0xff]
      %v206 = vld [vmem:[%s186 + $0x30] sm:$0xff]
      %v207 = vld [vmem:[%s186 + $0x38] sm:$0xff]
      %vm208 = vcmp.gt.f32.partialorder %v200, 0.5
      %vm209 = vcmp.gt.f32.partialorder %v201, 0.5
      %vm210 = vcmp.gt.f32.partialorder %v202, 0.5
      %vm211 = vcmp.gt.f32.partialorder %v203, 0.5
      %vm212 = vcmp.gt.f32.partialorder %v204, 0.5
      %vm213 = vcmp.gt.f32.partialorder %v205, 0.5
      %vm214 = vcmp.gt.f32.partialorder %v206, 0.5
      %vm215 = vcmp.gt.f32.partialorder %v207, 0.5
      %v216 = vsel %vm208, 1, 0
      %v217 = vsel %vm209, 1, 0
      %v218 = vsel %vm210, 1, 0
      %v219 = vsel %vm211, 1, 0
      %v220 = vsel %vm212, 1, 0
      %v221 = vsel %vm213, 1, 0
      %v222 = vsel %vm214, 1, 0
      %v223 = vsel %vm215, 1, 0
      %v224 = vcvt.s32.f32 %v216
      %v225 = vcvt.s32.f32 %v217
      %v226 = vcvt.s32.f32 %v218
      %v227 = vcvt.s32.f32 %v219
      %v228 = vcvt.s32.f32 %v220
      %v229 = vcvt.s32.f32 %v221
      %v230 = vcvt.s32.f32 %v222
      %v231 = vcvt.s32.f32 %v223
      %v232 = vadd.f32 %v224, %v225
      %v233 = vadd.f32 %v232, %v226
      %v234 = vadd.f32 %v233, %v227
      %v235 = vadd.f32 %v234, %v228
      %v236 = vadd.f32 %v235, %v229
      %v237 = vadd.f32 %v236, %v230
      %v238 = vadd.f32 %v237, %v231
      %v239 = vrot.slane %v238, 4
      %v240 = vadd.f32 %v238, %v239
      %v241 = vrot.slane %v240, 2
      %v242 = vadd.f32 %v240, %v241
      %v243 = vrot.slane %v242, 1
      %v244 = vadd.f32 %v242, %v243
      %v245 = vlaneseq
      %v246 = vand.u32 %v245, 127
      %vm247 = vcmp.lt.s32.totalorder %v246, 64
      %v248 = vsel %vm247, %v244, 0.0
      %249 = vadd.xlane.f32.xlu0 %v248
      %v250 = vpop.xlane.xlu0 %249
      %v251 = vsel %vm247, 0.0, %v244
      %252 = vadd.xlane.f32.xlu0 %v251
      %v253 = vpop.xlane.xlu0 %252
      %v254 = vsel %vm247, %v250, %v253
      %vm255 = vcmp.gt.f32.partialorder %v254, 0.5
      %v256 = vld [vmem:[%s191] sm:$0xff]
      %v257 = vld [vmem:[%s191 + $0x8] sm:$0xff]
      %v258 = vld [vmem:[%s191 + $0x10] sm:$0xff]
      %v259 = vld [vmem:[%s191 + $0x18] sm:$0xff]
      %v260 = vld [vmem:[%s191 + $0x20] sm:$0xff]
      %v261 = vld [vmem:[%s191 + $0x28] sm:$0xff]
      %v262 = vld [vmem:[%s191 + $0x30] sm:$0xff]
      %v263 = vld [vmem:[%s191 + $0x38] sm:$0xff]
      %v264 = vsel %vm255, 1, 0
      %vm265 = vcmp.eq.s32.totalorder %v264, 1
      %v266 = vsel %vm265, %v224, %v256
      %v267 = vsel %vm265, %v225, %v257
      %v268 = vsel %vm265, %v226, %v258
      %v269 = vsel %vm265, %v227, %v259
      %v270 = vsel %vm265, %v228, %v260
      %v271 = vsel %vm265, %v229, %v261
      %v272 = vsel %vm265, %v230, %v262
      %v273 = vsel %vm265, %v231, %v263
      %274 = vst [vmem:[%s196] sm:$0xff] %v266
      %275 = vst [vmem:[%s196 + $0x8] sm:$0xff] %v267
      %276 = vst [vmem:[%s196 + $0x10] sm:$0xff] %v268
      %277 = vst [vmem:[%s196 + $0x18] sm:$0xff] %v269
      %278 = vst [vmem:[%s196 + $0x20] sm:$0xff] %v270
      %279 = vst [vmem:[%s196 + $0x28] sm:$0xff] %v271
      %280 = vst [vmem:[%s196 + $0x30] sm:$0xff] %v272
      %281 = vst [vmem:[%s196 + $0x38] sm:$0xff] %v273
      %282 = vst [vmem:[%s199] sm:$0x1] %v254
      %p283 = scmp.lt.s32.totalorder %s15, 1
      %s284 = scalar_select %p283, %s15, 1
      %s285 = smul.addr %s284, 8
      %s286 = smul.addr %s285, 8
      %s287 = scalar_lea.vmem %s2, %s286
      %p288 = scmp.lt.s32.totalorder %s15, 1
      %s289 = scalar_select %p288, %s15, 1
      %s290 = scalar_lea.vmem %s3, %s289
      // Predicated region
      $region29: #{objectnav_agent_forward.3} parent=27 // pred_check
        %p291 = pneg %p85
      $region30: #{objectnav_agent_forward.3} parent=27 // pred_check_branch
        %293 = sbr.rel (%p291) target = $region32
      $region31: #{objectnav_agent_forward.3} parent=27 // pred_region
        _
      $region32: #{objectnav_agent_forward.3} parent=27 // pred_fallthru
        _
      // Predicated region
      $region33: #{objectnav_agent_forward.3} parent=27 // pred_check
        %p294 = pneg %p111
      $region34: #{objectnav_agent_forward.3} parent=27 // pred_check_branch
        %296 = sbr.rel (%p294) target = $region36
      $region35: #{objectnav_agent_forward.3} parent=27 // pred_region
        _
      $region36: #{objectnav_agent_forward.3} parent=27 // pred_fallthru
        _
    $region28: #{objectnav_agent_forward.3} parent=5 // pred_fallthru
      _
    %p297 = scmp.le.s32.totalorder 2, %s10
    // Predicated region
    $region37: #{objectnav_agent_forward.3} parent=5 // pred_check
      %p298 = pneg %p297
    $region38: #{objectnav_agent_forward.3} parent=5 // pred_check_branch
      %300 = sbr.rel (%p298) target = $region40
    $region39: #{objectnav_agent_forward.3} parent=5 // pred_region
      %s301 = ssub.s32 %s10, 2
      // Predicated region
      $region41: #{objectnav_agent_forward.3} parent=39 // pred_check
        %p302 = pneg %p91
      $region42: #{objectnav_agent_forward.3} parent=39 // pred_check_branch
        %304 = sbr.rel (%p302) target = $region44
      $region43: #{objectnav_agent_forward.3} parent=39 // pred_region
        %p305 = scmp.lt.s32.totalorder %s16, 1
        %s306 = scalar_select %p305, %s16, 1
        %s307 = smul.addr %s306, 8
        %s308 = smul.addr %s307, 8
        %s309 = scalar_lea.vmem %s2, %s308
      $region44: #{objectnav_agent_forward.3} parent=39 // pred_fallthru
        _
      // Predicated region
      $region45: #{objectnav_agent_forward.3} parent=39 // pred_check
        %p310 = pneg %p117
      $region46: #{objectnav_agent_forward.3} parent=39 // pred_check_branch
        %312 = sbr.rel (%p310) target = $region48
      $region47: #{objectnav_agent_forward.3} parent=39 // pred_region
        %p313 = scmp.lt.s32.totalorder %s16, 1
        %s314 = scalar_select %p313, %s16, 1
        %s315 = scalar_lea.vmem %s3, %s314
      $region48: #{objectnav_agent_forward.3} parent=39 // pred_fallthru
        _
    $region40: #{objectnav_agent_forward.3} parent=5 // pred_fallthru
      _
  $region6: #{objectnav_agent_forward.3} parent=0 // loop_footer
    %s14 = sadd.s32 1, %s10
  $region7: #{objectnav_agent_forward.3} parent=0 // loop_footer_branch
    %9 = sbr.rel target = $region3
  $region8: #{objectnav_agent_forward.3} parent=0 // loop_exit
    _

// kernel: custom-call.4
$region0: #{custom-call.4}
  %s0 = inlined_call_operand.vmem [shape: f32[2,2,3], index: 0, kind: output, shape index: {}]

</llo_original>
